<compile_context>
chip_gen: v7x
topology: tpu7x:2x2x1
jax: 0.10.0
libtpu: 0.0.40
codegen_flags: <defaults>
</compile_context>

<pallas_src>
import functools

import jax
import jax.numpy as jnp
from jax import lax
from jax.experimental import pallas as pl
from jax.experimental.pallas import tpu as pltpu


def _reverse_edge_attn_kernel(w_ref, region_ref, col_ref, boundary_ref, out_ref,
                              pad_avg, pad_max, attn_ref,
                              *, C, K, W, S, CH, HD, STRIP):
    # w_ref:        SMEM (2*K*K,) f32 conv weights, [in_ch, ky, kx] order;
    #               avg-channel weights are pre-scaled by 1/C (mean folded in).
    # region_ref:   VMEM (1, C, S, CH) region_out, native dtype (CH = H*W / S).
    # col_ref:      VMEM (S, CH) int32, flat position -> column index (p % W).
    # boundary_ref: VMEM (1, CBT, HW) boundary tile, native dtype.
    # out_ref:      VMEM (1, CBT, HW).
    # pad_avg/max:  VMEM (S, CH + 2*HD) f32 chunked, halo-padded avg/max slabs.
    # attn_ref:     VMEM (8, HW) f32 attention map, pre-broadcast to 8 sublanes.
    pad = (K - 1) // 2
    cb = pl.program_id(1)

    @pl.when(cb == 0)
    def _compute_attention():
        # ---- channel sum & max, sublane-dense (S, CH) chunks, single pass ----
        v = region_ref[0, 0].astype(jnp.float32)
        csum = v
        cmax = v
        for c in range(1, C):
            v = region_ref[0, c].astype(jnp.float32)
            csum = csum + v
            cmax = jnp.maximum(cmax, v)

        # ---- build the halo-padded slabs (zero only the true halo rows) ----
        zrow = jnp.zeros((1, HD), jnp.float32)
        for slab, src in ((pad_avg, csum), (pad_max, cmax)):
            slab[pl.ds(0, 1), pl.ds(0, HD)] = zrow              # global left pad
            slab[pl.ds(S - 1, 1), pl.ds(HD + CH, HD)] = zrow    # global right pad
            slab[:, pl.ds(HD, CH)] = src                        # interior
            if S > 1:
                # left halo of chunk c <- tail of chunk c-1
                slab[pl.ds(1, S - 1), pl.ds(0, HD)] = src[0:S - 1, CH - HD:CH]
                # right halo of chunk c <- head of chunk c+1
                slab[pl.ds(0, S - 1), pl.ds(HD + CH, HD)] = src[1:S, 0:HD]

        # Hoist the SMEM weight reads out of the strip loop.
        wa = [w_ref[i] for i in range(K * K)]            # avg weights (already /C)
        wm = [w_ref[K * K + i] for i in range(K * K)]    # max weights

        # ---- 7x7 conv as 98 static-offset taps on dense (S, strip) tiles ----
        for s0 in range(0, CH, STRIP):
            sl = min(STRIP, CH - s0)
            col = col_ref[:, pl.ds(s0, sl)]              # (S, sl) int32
            acc = jnp.zeros((S, sl), jnp.float32)
            for kx in range(K):
                dx = kx - pad
                part = None
                for ky in range(K):
                    dy = ky - pad
                    off = HD + dy * W + dx + s0          # static offset
                    term = (wa[ky * K + kx] * pad_avg[:, pl.ds(off, sl)]
                            + wm[ky * K + kx] * pad_max[:, pl.ds(off, sl)])
                    part = term if part is None else part + term
                if dx == 0:
                    acc = acc + part
                elif dx > 0:
                    acc = acc + jnp.where(col < (W - dx), part, 0.0)
                else:
                    acc = acc + jnp.where(col >= (-dx), part, 0.0)

            strip_attn = 1.0 - jax.nn.sigmoid(acc)       # (S, sl) f32
            # Scatter chunk rows into the flat attention map, pre-broadcast
            # to all 8 sublanes (once per sample).
            for c in range(S):
                attn_ref[:, pl.ds(c * CH + s0, sl)] = jnp.broadcast_to(
                    strip_attn[c:c + 1, :], (8, sl))

    # ---- lane-dense broadcast multiply over the current Cb tile ----
    cbt = boundary_ref.shape[1]
    for r0 in range(0, cbt, 8):
        rs = min(8, cbt - r0)
        att = attn_ref[pl.ds(0, rs), :]                              # (rs, HW) f32
        blk = boundary_ref[0, pl.ds(r0, rs), :].astype(jnp.float32)  # (rs, HW)
        out_ref[0, pl.ds(r0, rs), :] = (blk * att).astype(out_ref.dtype)


def reverse_edge_attention(region_out, boundary_feature, conv_weight):
    """region_out: (N, C, H, W); boundary_feature: (N, Cb, H, W);
    conv_weight: (1, 2, K, K) PyTorch Conv2d weight (OIHW), no bias."""
    N, C, H, W = region_out.shape
    Nb, Cb, Hb, Wb = boundary_feature.shape
    assert (N, H, W) == (Nb, Hb, Wb)
    K = conv_weight.shape[-1]
    assert conv_weight.shape == (1, 2, K, K)
    pad = (K - 1) // 2
    HW = H * W
    HD = pad * W + pad                      # largest |flat tap shift| (halo width)

    # Sublane-chunk count: largest S such that the flat map splits into S equal
    # chunks, each long enough to borrow its halo from a single neighbour chunk.
    S = 1
    for cand in (8, 4, 2):
        if HW % cand == 0 and HW // cand >= HD:
            S = cand
            break
    CH = HW // S

    # Fold the 1/C of the channel mean into the avg-channel conv weights.
    w2 = conv_weight.reshape(2, K, K).astype(jnp.float32)
    w2 = w2 * jnp.array([1.0 / C, 1.0], jnp.float32)[:, None, None]
    w_flat = w2.reshape(-1)                                 # (2*K*K,)

    # Free row-major reshapes.
    region2 = region_out.reshape(N, C, S, CH)       # sublane-dense reduction layout
    boundary2 = boundary_feature.reshape(N, Cb, HW)  # lane-dense multiply layout
    col2 = (jnp.arange(HW, dtype=jnp.int32) % W).reshape(S, CH)

    # ---- per-generation VMEM budgeting & Cb tiling ----
    rsize = region_out.dtype.itemsize
    bsize = boundary_feature.dtype.itemsize
    try:
        vmem_cap = int(pltpu.get_tpu_info().vmem_capacity_bytes)
    except Exception:
        vmem_cap = 64 * 1024 * 1024                  # v7x-safe fallback
    vmem_limit = min(int(vmem_cap * 0.8), 100 * 1024 * 1024)
    budget = vmem_limit - 4 * 1024 * 1024

    fixed = (2 * C * HW * rsize                      # region block (double buffered)
             + 2 * HW * 4                            # column-id map
             + 2 * S * (CH + 2 * HD) * 4             # padded avg/max slabs
             + 8 * HW * 4                            # broadcast attention map
             + 2 * 1024 * 1024)                      # compiler-internal headroom
    per_ch = 5 * HW * bsize                          # 3x boundary + 2x out buffers

    def _fits(d):
        return fixed + d * per_ch <= budget

    cand = [d for d in range(1, Cb + 1)
            if Cb % d == 0 and (d == Cb or d % 8 == 0) and _fits(d)]
    if not cand:
        cand = [d for d in range(1, Cb + 1) if Cb % d == 0 and _fits(d)] or [1]
    cb_tile = max(cand)
    n_cb = Cb // cb_tile
    need = fixed + cb_tile * per_ch + 2 * 1024 * 1024
    vmem_limit = max(vmem_limit, min(need, int(vmem_cap * 0.95)))

    kernel = functools.partial(_reverse_edge_attn_kernel,
                               C=C, K=K, W=W, S=S, CH=CH, HD=HD, STRIP=512)

    rmap = lambda n, cb, w: (n, 0, 0, 0)
    cmap = lambda n, cb, w: (0, 0)
    bmap = lambda n, cb, w: (n, cb, 0)

    def _boundary_spec(multibuffer):
        if multibuffer and hasattr(pl, "Buffered"):
            try:
                return pl.BlockSpec((1, cb_tile, HW), bmap,
                                    pipeline_mode=pl.Buffered(3))
            except TypeError:
                pass
        return pl.BlockSpec((1, cb_tile, HW), bmap)

    def _call(multibuffer):
        return pl.pallas_call(
            kernel,
            out_shape=jax.ShapeDtypeStruct((N, Cb, HW), boundary_feature.dtype),
            grid_spec=pltpu.PrefetchScalarGridSpec(
                num_scalar_prefetch=1,               # conv weights -> SMEM
                grid=(N, n_cb),
                in_specs=[
                    pl.BlockSpec((1, C, S, CH), rmap),
                    pl.BlockSpec((S, CH), cmap),
                    _boundary_spec(multibuffer),
                ],
                out_specs=pl.BlockSpec((1, cb_tile, HW), bmap),
                scratch_shapes=[
                    pltpu.VMEM((S, CH + 2 * HD), jnp.float32),   # padded avg slab
                    pltpu.VMEM((S, CH + 2 * HD), jnp.float32),   # padded max slab
                    pltpu.VMEM((8, HW), jnp.float32),            # attn (8-sublane bcast)
                ],
            ),
            compiler_params=pltpu.CompilerParams(
                dimension_semantics=("parallel", "arbitrary"),
                vmem_limit_bytes=int(vmem_limit),
            ),
        )(w_flat, region2, col2, boundary2)

    # TODO(synk): for batch-1 on dual-TensorCore chips (v7x), add a leading
    # size-2 'parallel' grid axis that splits the Cb tiles across both cores
    # (the cheap attention compute is simply duplicated per core).
    try:
        out2 = _call(True)
    except Exception:
        out2 = _call(False)      # fall back if Buffered(3) is unavailable

    return out2.reshape(N, Cb, H, W)


def _reference(region_out, boundary_feature, conv_weight):
    avg = jnp.mean(region_out, axis=1, keepdims=True)
    mx = jnp.max(region_out, axis=1, keepdims=True)
    x = jnp.concatenate([avg, mx], axis=1)
    y = lax.conv_general_dilated(
        x, conv_weight, window_strides=(1, 1), padding="SAME",
        dimension_numbers=("NCHW", "OIHW", "NCHW"))
    attn = 1.0 - jax.nn.sigmoid(y)
    return boundary_feature * attn


if __name__ == "__main__":
    key = jax.random.PRNGKey(0)
    k1, k2, k3 = jax.random.split(key, 3)

    N, C, Cb, H, W, K = 2, 4, 8, 16, 16, 7
    region = jax.random.normal(k1, (N, C, H, W), jnp.float32)
    boundary = jax.random.normal(k2, (N, Cb, H, W), jnp.float32)

    # Deterministic Conv2d(2, 1, 7, bias=False) weight (kaiming-uniform-like scale).
    fan_in = 2 * K * K
    bound = 1.0 / (fan_in ** 0.5)
    weight = jax.random.uniform(k3, (1, 2, K, K), jnp.float32, -bound, bound)

    out = reverse_edge_attention(region, boundary, weight)
    out = jax.block_until_ready(out)

    ref = _reference(region, boundary, weight)
    assert out.shape == (N, Cb, H, W)
    max_err = float(jnp.max(jnp.abs(out - ref)))
    assert jnp.allclose(out, ref, atol=2e-5, rtol=2e-5), max_err
    print("KERNEL_OK")
</pallas_src>

<mosaic_0001>
module attributes {stable_mosaic.version = 11 : i64} {
  func.func @_reverse_edge_attn_kernel(%arg0: i32, %arg1: i32, %arg2: memref<98xf32, #tpu.memory_space<smem>>, %arg3: memref<1x4x4x64xf32, #tpu.memory_space<vmem>>, %arg4: memref<4x64xi32, #tpu.memory_space<vmem>>, %arg5: memref<1x8x256xf32, #tpu.memory_space<vmem>>, %arg6: memref<1x8x256xf32, #tpu.memory_space<vmem>>, %arg7: memref<4x166xf32, #tpu.memory_space<vmem>>, %arg8: memref<4x166xf32, #tpu.memory_space<vmem>>, %arg9: memref<8x256xf32, #tpu.memory_space<vmem>>) attributes {dimension_semantics = [#tpu.dimension_semantics<parallel>, #tpu.dimension_semantics<arbitrary>], iteration_bounds = array<i64: 2, 1>, scalar_prefetch = 1 : i64, scratch_operands = 3 : i64, tpu.core_type = #tpu.core_type<tc>, window_params = [{transform_indices = @transform_0, window_bounds = array<i64: 1, 4, 4, 64>}, {pipeline_mode = #tpu.pipeline_mode<synchronous>, transform_indices = @transform_1, window_bounds = array<i64: 4, 64>}, {transform_indices = @transform_2, window_bounds = array<i64: 1, 8, 256>}, {transform_indices = @transform_3, window_bounds = array<i64: 1, 8, 256>}]} {
    %c0_i32 = arith.constant 0 : i32
    %0 = arith.cmpi eq, %arg1, %c0_i32 : i32
    %1 = arith.extui %0 : i1 to i32
    %c0_i32_0 = arith.constant 0 : i32
    %2 = arith.cmpi ne, %1, %c0_i32_0 : i32
    scf.if %2 {
      %c0_8 = arith.constant 0 : index
      %c0_9 = arith.constant 0 : index
      %c0_10 = arith.constant 0 : index
      %c0_11 = arith.constant 0 : index
      %10 = vector.load %arg3[%c0_8, %c0_9, %c0_10, %c0_11] : memref<1x4x4x64xf32, #tpu.memory_space<vmem>>, vector<1x1x4x64xf32>
      %11 = vector.shape_cast %10 : vector<1x1x4x64xf32> to vector<4x64xf32>
      %c0_12 = arith.constant 0 : index
      %c1 = arith.constant 1 : index
      %c0_13 = arith.constant 0 : index
      %c0_14 = arith.constant 0 : index
      %12 = vector.load %arg3[%c0_12, %c1, %c0_13, %c0_14] : memref<1x4x4x64xf32, #tpu.memory_space<vmem>>, vector<1x1x4x64xf32>
      %13 = vector.shape_cast %12 : vector<1x1x4x64xf32> to vector<4x64xf32>
      %14 = arith.addf %11, %13 : vector<4x64xf32>
      %15 = arith.maximumf %11, %13 : vector<4x64xf32>
      %c0_15 = arith.constant 0 : index
      %c2 = arith.constant 2 : index
      %c0_16 = arith.constant 0 : index
      %c0_17 = arith.constant 0 : index
      %16 = vector.load %arg3[%c0_15, %c2, %c0_16, %c0_17] : memref<1x4x4x64xf32, #tpu.memory_space<vmem>>, vector<1x1x4x64xf32>
      %17 = vector.shape_cast %16 : vector<1x1x4x64xf32> to vector<4x64xf32>
      %18 = arith.addf %14, %17 : vector<4x64xf32>
      %19 = arith.maximumf %15, %17 : vector<4x64xf32>
      %c0_18 = arith.constant 0 : index
      %c3 = arith.constant 3 : index
      %c0_19 = arith.constant 0 : index
      %c0_20 = arith.constant 0 : index
      %20 = vector.load %arg3[%c0_18, %c3, %c0_19, %c0_20] : memref<1x4x4x64xf32, #tpu.memory_space<vmem>>, vector<1x1x4x64xf32>
      %21 = vector.shape_cast %20 : vector<1x1x4x64xf32> to vector<4x64xf32>
      %22 = arith.addf %18, %21 : vector<4x64xf32>
      %23 = arith.maximumf %19, %21 : vector<4x64xf32>
      %cst = arith.constant 0.000000e+00 : f32
      %24 = vector.broadcast %cst : f32 to vector<1x51xf32>
      %c0_21 = arith.constant 0 : index
      %c0_22 = arith.constant 0 : index
      %25 = vector.load %arg7[%c0_21, %c0_22] : memref<4x166xf32, #tpu.memory_space<vmem>>, vector<1x51xf32>
      tpu.vector_store %arg7[%c0_21, %c0_22], %24 {strides = array<i32>} : memref<4x166xf32, #tpu.memory_space<vmem>>, vector<1x51xf32>,
      %c3_23 = arith.constant 3 : index
      %c115 = arith.constant 115 : index
      %26 = vector.load %arg7[%c3_23, %c115] : memref<4x166xf32, #tpu.memory_space<vmem>>, vector<1x51xf32>
      tpu.vector_store %arg7[%c3_23, %c115], %24 {strides = array<i32>} : memref<4x166xf32, #tpu.memory_space<vmem>>, vector<1x51xf32>,
      %c0_24 = arith.constant 0 : index
      %c51 = arith.constant 51 : index
      %27 = vector.load %arg7[%c0_24, %c51] : memref<4x166xf32, #tpu.memory_space<vmem>>, vector<4x64xf32>
      tpu.vector_store %arg7[%c0_24, %c51], %22 {strides = array<i32>} : memref<4x166xf32, #tpu.memory_space<vmem>>, vector<4x64xf32>,
      %28 = vector.extract_strided_slice %22 {offsets = [0, 13], sizes = [3, 51], strides = [1, 1]} : vector<4x64xf32> to vector<3x51xf32>
      %c1_25 = arith.constant 1 : index
      %c0_26 = arith.constant 0 : index
      %29 = vector.load %arg7[%c1_25, %c0_26] : memref<4x166xf32, #tpu.memory_space<vmem>>, vector<3x51xf32>
      tpu.vector_store %arg7[%c1_25, %c0_26], %28 {strides = array<i32>} : memref<4x166xf32, #tpu.memory_space<vmem>>, vector<3x51xf32>,
      %30 = vector.extract_strided_slice %22 {offsets = [1, 0], sizes = [3, 51], strides = [1, 1]} : vector<4x64xf32> to vector<3x51xf32>
      %c0_27 = arith.constant 0 : index
      %c115_28 = arith.constant 115 : index
      %31 = vector.load %arg7[%c0_27, %c115_28] : memref<4x166xf32, #tpu.memory_space<vmem>>, vector<3x51xf32>
      tpu.vector_store %arg7[%c0_27, %c115_28], %30 {strides = array<i32>} : memref<4x166xf32, #tpu.memory_space<vmem>>, vector<3x51xf32>,
      %c0_29 = arith.constant 0 : index
      %c0_30 = arith.constant 0 : index
      %32 = vector.load %arg8[%c0_29, %c0_30] : memref<4x166xf32, #tpu.memory_space<vmem>>, vector<1x51xf32>
      tpu.vector_store %arg8[%c0_29, %c0_30], %24 {strides = array<i32>} : memref<4x166xf32, #tpu.memory_space<vmem>>, vector<1x51xf32>,
      %c3_31 = arith.constant 3 : index
      %c115_32 = arith.constant 115 : index
      %33 = vector.load %arg8[%c3_31, %c115_32] : memref<4x166xf32, #tpu.memory_space<vmem>>, vector<1x51xf32>
      tpu.vector_store %arg8[%c3_31, %c115_32], %24 {strides = array<i32>} : memref<4x166xf32, #tpu.memory_space<vmem>>, vector<1x51xf32>,
      %c0_33 = arith.constant 0 : index
      %c51_34 = arith.constant 51 : index
      %34 = vector.load %arg8[%c0_33, %c51_34] : memref<4x166xf32, #tpu.memory_space<vmem>>, vector<4x64xf32>
      tpu.vector_store %arg8[%c0_33, %c51_34], %23 {strides = array<i32>} : memref<4x166xf32, #tpu.memory_space<vmem>>, vector<4x64xf32>,
      %35 = vector.extract_strided_slice %23 {offsets = [0, 13], sizes = [3, 51], strides = [1, 1]} : vector<4x64xf32> to vector<3x51xf32>
      %c1_35 = arith.constant 1 : index
      %c0_36 = arith.constant 0 : index
      %36 = vector.load %arg8[%c1_35, %c0_36] : memref<4x166xf32, #tpu.memory_space<vmem>>, vector<3x51xf32>
      tpu.vector_store %arg8[%c1_35, %c0_36], %35 {strides = array<i32>} : memref<4x166xf32, #tpu.memory_space<vmem>>, vector<3x51xf32>,
      %37 = vector.extract_strided_slice %23 {offsets = [1, 0], sizes = [3, 51], strides = [1, 1]} : vector<4x64xf32> to vector<3x51xf32>
      %c0_37 = arith.constant 0 : index
      %c115_38 = arith.constant 115 : index
      %38 = vector.load %arg8[%c0_37, %c115_38] : memref<4x166xf32, #tpu.memory_space<vmem>>, vector<3x51xf32>
      tpu.vector_store %arg8[%c0_37, %c115_38], %37 {strides = array<i32>} : memref<4x166xf32, #tpu.memory_space<vmem>>, vector<3x51xf32>,
      %c0_39 = arith.constant 0 : index
      %39 = memref.load %arg2[%c0_39] : memref<98xf32, #tpu.memory_space<smem>>
      %c1_40 = arith.constant 1 : index
      %40 = memref.load %arg2[%c1_40] : memref<98xf32, #tpu.memory_space<smem>>
      %c2_41 = arith.constant 2 : index
      %41 = memref.load %arg2[%c2_41] : memref<98xf32, #tpu.memory_space<smem>>
      %c3_42 = arith.constant 3 : index
      %42 = memref.load %arg2[%c3_42] : memref<98xf32, #tpu.memory_space<smem>>
      %c4 = arith.constant 4 : index
      %43 = memref.load %arg2[%c4] : memref<98xf32, #tpu.memory_space<smem>>
      %c5 = arith.constant 5 : index
      %44 = memref.load %arg2[%c5] : memref<98xf32, #tpu.memory_space<smem>>
      %c6 = arith.constant 6 : index
      %45 = memref.load %arg2[%c6] : memref<98xf32, #tpu.memory_space<smem>>
      %c7 = arith.constant 7 : index
      %46 = memref.load %arg2[%c7] : memref<98xf32, #tpu.memory_space<smem>>
      %c8 = arith.constant 8 : index
      %47 = memref.load %arg2[%c8] : memref<98xf32, #tpu.memory_space<smem>>
      %c9 = arith.constant 9 : index
      %48 = memref.load %arg2[%c9] : memref<98xf32, #tpu.memory_space<smem>>
      %c10 = arith.constant 10 : index
      %49 = memref.load %arg2[%c10] : memref<98xf32, #tpu.memory_space<smem>>
      %c11 = arith.constant 11 : index
      %50 = memref.load %arg2[%c11] : memref<98xf32, #tpu.memory_space<smem>>
      %c12 = arith.constant 12 : index
      %51 = memref.load %arg2[%c12] : memref<98xf32, #tpu.memory_space<smem>>
      %c13 = arith.constant 13 : index
      %52 = memref.load %arg2[%c13] : memref<98xf32, #tpu.memory_space<smem>>
      %c14 = arith.constant 14 : index
      %53 = memref.load %arg2[%c14] : memref<98xf32, #tpu.memory_space<smem>>
      %c15 = arith.constant 15 : index
      %54 = memref.load %arg2[%c15] : memref<98xf32, #tpu.memory_space<smem>>
      %c16 = arith.constant 16 : index
      %55 = memref.load %arg2[%c16] : memref<98xf32, #tpu.memory_space<smem>>
      %c17 = arith.constant 17 : index
      %56 = memref.load %arg2[%c17] : memref<98xf32, #tpu.memory_space<smem>>
      %c18 = arith.constant 18 : index
      %57 = memref.load %arg2[%c18] : memref<98xf32, #tpu.memory_space<smem>>
      %c19 = arith.constant 19 : index
      %58 = memref.load %arg2[%c19] : memref<98xf32, #tpu.memory_space<smem>>
      %c20 = arith.constant 20 : index
      %59 = memref.load %arg2[%c20] : memref<98xf32, #tpu.memory_space<smem>>
      %c21 = arith.constant 21 : index
      %60 = memref.load %arg2[%c21] : memref<98xf32, #tpu.memory_space<smem>>
      %c22 = arith.constant 22 : index
      %61 = memref.load %arg2[%c22] : memref<98xf32, #tpu.memory_space<smem>>
      %c23 = arith.constant 23 : index
      %62 = memref.load %arg2[%c23] : memref<98xf32, #tpu.memory_space<smem>>
      %c24 = arith.constant 24 : index
      %63 = memref.load %arg2[%c24] : memref<98xf32, #tpu.memory_space<smem>>
      %c25 = arith.constant 25 : index
      %64 = memref.load %arg2[%c25] : memref<98xf32, #tpu.memory_space<smem>>
      %c26 = arith.constant 26 : index
      %65 = memref.load %arg2[%c26] : memref<98xf32, #tpu.memory_space<smem>>
      %c27 = arith.constant 27 : index
      %66 = memref.load %arg2[%c27] : memref<98xf32, #tpu.memory_space<smem>>
      %c28 = arith.constant 28 : index
      %67 = memref.load %arg2[%c28] : memref<98xf32, #tpu.memory_space<smem>>
      %c29 = arith.constant 29 : index
      %68 = memref.load %arg2[%c29] : memref<98xf32, #tpu.memory_space<smem>>
      %c30 = arith.constant 30 : index
      %69 = memref.load %arg2[%c30] : memref<98xf32, #tpu.memory_space<smem>>
      %c31 = arith.constant 31 : index
      %70 = memref.load %arg2[%c31] : memref<98xf32, #tpu.memory_space<smem>>
      %c32 = arith.constant 32 : index
      %71 = memref.load %arg2[%c32] : memref<98xf32, #tpu.memory_space<smem>>
      %c33 = arith.constant 33 : index
      %72 = memref.load %arg2[%c33] : memref<98xf32, #tpu.memory_space<smem>>
      %c34 = arith.constant 34 : index
      %73 = memref.load %arg2[%c34] : memref<98xf32, #tpu.memory_space<smem>>
      %c35 = arith.constant 35 : index
      %74 = memref.load %arg2[%c35] : memref<98xf32, #tpu.memory_space<smem>>
      %c36 = arith.constant 36 : index
      %75 = memref.load %arg2[%c36] : memref<98xf32, #tpu.memory_space<smem>>
      %c37 = arith.constant 37 : index
      %76 = memref.load %arg2[%c37] : memref<98xf32, #tpu.memory_space<smem>>
      %c38 = arith.constant 38 : index
      %77 = memref.load %arg2[%c38] : memref<98xf32, #tpu.memory_space<smem>>
      %c39 = arith.constant 39 : index
      %78 = memref.load %arg2[%c39] : memref<98xf32, #tpu.memory_space<smem>>
      %c40 = arith.constant 40 : index
      %79 = memref.load %arg2[%c40] : memref<98xf32, #tpu.memory_space<smem>>
      %c41 = arith.constant 41 : index
      %80 = memref.load %arg2[%c41] : memref<98xf32, #tpu.memory_space<smem>>
      %c42 = arith.constant 42 : index
      %81 = memref.load %arg2[%c42] : memref<98xf32, #tpu.memory_space<smem>>
      %c43 = arith.constant 43 : index
      %82 = memref.load %arg2[%c43] : memref<98xf32, #tpu.memory_space<smem>>
      %c44 = arith.constant 44 : index
      %83 = memref.load %arg2[%c44] : memref<98xf32, #tpu.memory_space<smem>>
      %c45 = arith.constant 45 : index
      %84 = memref.load %arg2[%c45] : memref<98xf32, #tpu.memory_space<smem>>
      %c46 = arith.constant 46 : index
      %85 = memref.load %arg2[%c46] : memref<98xf32, #tpu.memory_space<smem>>
      %c47 = arith.constant 47 : index
      %86 = memref.load %arg2[%c47] : memref<98xf32, #tpu.memory_space<smem>>
      %c48 = arith.constant 48 : index
      %87 = memref.load %arg2[%c48] : memref<98xf32, #tpu.memory_space<smem>>
      %c49 = arith.constant 49 : index
      %88 = memref.load %arg2[%c49] : memref<98xf32, #tpu.memory_space<smem>>
      %c50 = arith.constant 50 : index
      %89 = memref.load %arg2[%c50] : memref<98xf32, #tpu.memory_space<smem>>
      %c51_43 = arith.constant 51 : index
      %90 = memref.load %arg2[%c51_43] : memref<98xf32, #tpu.memory_space<smem>>
      %c52 = arith.constant 52 : index
      %91 = memref.load %arg2[%c52] : memref<98xf32, #tpu.memory_space<smem>>
      %c53 = arith.constant 53 : index
      %92 = memref.load %arg2[%c53] : memref<98xf32, #tpu.memory_space<smem>>
      %c54 = arith.constant 54 : index
      %93 = memref.load %arg2[%c54] : memref<98xf32, #tpu.memory_space<smem>>
      %c55 = arith.constant 55 : index
      %94 = memref.load %arg2[%c55] : memref<98xf32, #tpu.memory_space<smem>>
      %c56 = arith.constant 56 : index
      %95 = memref.load %arg2[%c56] : memref<98xf32, #tpu.memory_space<smem>>
      %c57 = arith.constant 57 : index
      %96 = memref.load %arg2[%c57] : memref<98xf32, #tpu.memory_space<smem>>
      %c58 = arith.constant 58 : index
      %97 = memref.load %arg2[%c58] : memref<98xf32, #tpu.memory_space<smem>>
      %c59 = arith.constant 59 : index
      %98 = memref.load %arg2[%c59] : memref<98xf32, #tpu.memory_space<smem>>
      %c60 = arith.constant 60 : index
      %99 = memref.load %arg2[%c60] : memref<98xf32, #tpu.memory_space<smem>>
      %c61 = arith.constant 61 : index
      %100 = memref.load %arg2[%c61] : memref<98xf32, #tpu.memory_space<smem>>
      %c62 = arith.constant 62 : index
      %101 = memref.load %arg2[%c62] : memref<98xf32, #tpu.memory_space<smem>>
      %c63 = arith.constant 63 : index
      %102 = memref.load %arg2[%c63] : memref<98xf32, #tpu.memory_space<smem>>
      %c64 = arith.constant 64 : index
      %103 = memref.load %arg2[%c64] : memref<98xf32, #tpu.memory_space<smem>>
      %c65 = arith.constant 65 : index
      %104 = memref.load %arg2[%c65] : memref<98xf32, #tpu.memory_space<smem>>
      %c66 = arith.constant 66 : index
      %105 = memref.load %arg2[%c66] : memref<98xf32, #tpu.memory_space<smem>>
      %c67 = arith.constant 67 : index
      %106 = memref.load %arg2[%c67] : memref<98xf32, #tpu.memory_space<smem>>
      %c68 = arith.constant 68 : index
      %107 = memref.load %arg2[%c68] : memref<98xf32, #tpu.memory_space<smem>>
      %c69 = arith.constant 69 : index
      %108 = memref.load %arg2[%c69] : memref<98xf32, #tpu.memory_space<smem>>
      %c70 = arith.constant 70 : index
      %109 = memref.load %arg2[%c70] : memref<98xf32, #tpu.memory_space<smem>>
      %c71 = arith.constant 71 : index
      %110 = memref.load %arg2[%c71] : memref<98xf32, #tpu.memory_space<smem>>
      %c72 = arith.constant 72 : index
      %111 = memref.load %arg2[%c72] : memref<98xf32, #tpu.memory_space<smem>>
      %c73 = arith.constant 73 : index
      %112 = memref.load %arg2[%c73] : memref<98xf32, #tpu.memory_space<smem>>
      %c74 = arith.constant 74 : index
      %113 = memref.load %arg2[%c74] : memref<98xf32, #tpu.memory_space<smem>>
      %c75 = arith.constant 75 : index
      %114 = memref.load %arg2[%c75] : memref<98xf32, #tpu.memory_space<smem>>
      %c76 = arith.constant 76 : index
      %115 = memref.load %arg2[%c76] : memref<98xf32, #tpu.memory_space<smem>>
      %c77 = arith.constant 77 : index
      %116 = memref.load %arg2[%c77] : memref<98xf32, #tpu.memory_space<smem>>
      %c78 = arith.constant 78 : index
      %117 = memref.load %arg2[%c78] : memref<98xf32, #tpu.memory_space<smem>>
      %c79 = arith.constant 79 : index
      %118 = memref.load %arg2[%c79] : memref<98xf32, #tpu.memory_space<smem>>
      %c80 = arith.constant 80 : index
      %119 = memref.load %arg2[%c80] : memref<98xf32, #tpu.memory_space<smem>>
      %c81 = arith.constant 81 : index
      %120 = memref.load %arg2[%c81] : memref<98xf32, #tpu.memory_space<smem>>
      %c82 = arith.constant 82 : index
      %121 = memref.load %arg2[%c82] : memref<98xf32, #tpu.memory_space<smem>>
      %c83 = arith.constant 83 : index
      %122 = memref.load %arg2[%c83] : memref<98xf32, #tpu.memory_space<smem>>
      %c84 = arith.constant 84 : index
      %123 = memref.load %arg2[%c84] : memref<98xf32, #tpu.memory_space<smem>>
      %c85 = arith.constant 85 : index
      %124 = memref.load %arg2[%c85] : memref<98xf32, #tpu.memory_space<smem>>
      %c86 = arith.constant 86 : index
      %125 = memref.load %arg2[%c86] : memref<98xf32, #tpu.memory_space<smem>>
      %c87 = arith.constant 87 : index
      %126 = memref.load %arg2[%c87] : memref<98xf32, #tpu.memory_space<smem>>
      %c88 = arith.constant 88 : index
      %127 = memref.load %arg2[%c88] : memref<98xf32, #tpu.memory_space<smem>>
      %c89 = arith.constant 89 : index
      %128 = memref.load %arg2[%c89] : memref<98xf32, #tpu.memory_space<smem>>
      %c90 = arith.constant 90 : index
      %129 = memref.load %arg2[%c90] : memref<98xf32, #tpu.memory_space<smem>>
      %c91 = arith.constant 91 : index
      %130 = memref.load %arg2[%c91] : memref<98xf32, #tpu.memory_space<smem>>
      %c92 = arith.constant 92 : index
      %131 = memref.load %arg2[%c92] : memref<98xf32, #tpu.memory_space<smem>>
      %c93 = arith.constant 93 : index
      %132 = memref.load %arg2[%c93] : memref<98xf32, #tpu.memory_space<smem>>
      %c94 = arith.constant 94 : index
      %133 = memref.load %arg2[%c94] : memref<98xf32, #tpu.memory_space<smem>>
      %c95 = arith.constant 95 : index
      %134 = memref.load %arg2[%c95] : memref<98xf32, #tpu.memory_space<smem>>
      %c96 = arith.constant 96 : index
      %135 = memref.load %arg2[%c96] : memref<98xf32, #tpu.memory_space<smem>>
      %c97 = arith.constant 97 : index
      %136 = memref.load %arg2[%c97] : memref<98xf32, #tpu.memory_space<smem>>
      %c0_44 = arith.constant 0 : index
      %c0_45 = arith.constant 0 : index
      %137 = vector.load %arg4[%c0_44, %c0_45] : memref<4x64xi32, #tpu.memory_space<vmem>>, vector<4x64xi32>
      %cst_46 = arith.constant 0.000000e+00 : f32
      %138 = vector.broadcast %cst_46 : f32 to vector<4x64xf32>
      %c0_47 = arith.constant 0 : index
      %c0_48 = arith.constant 0 : index
      %139 = vector.load %arg7[%c0_47, %c0_48] : memref<4x166xf32, #tpu.memory_space<vmem>>, vector<4x64xf32>
      %140 = vector.broadcast %39 : f32 to vector<4x64xf32>
      %141 = arith.mulf %140, %139 : vector<4x64xf32>
      %c0_49 = arith.constant 0 : index
      %c0_50 = arith.constant 0 : index
      %142 = vector.load %arg8[%c0_49, %c0_50] : memref<4x166xf32, #tpu.memory_space<vmem>>, vector<4x64xf32>
      %143 = vector.broadcast %88 : f32 to vector<4x64xf32>
      %144 = arith.mulf %143, %142 : vector<4x64xf32>
      %145 = arith.addf %141, %144 : vector<4x64xf32>
      %c0_51 = arith.constant 0 : index
      %c16_52 = arith.constant 16 : index
      %146 = vector.load %arg7[%c0_51, %c16_52] : memref<4x166xf32, #tpu.memory_space<vmem>>, vector<4x64xf32>
      %147 = vector.broadcast %46 : f32 to vector<4x64xf32>
      %148 = arith.mulf %147, %146 : vector<4x64xf32>
      %c0_53 = arith.constant 0 : index
      %c16_54 = arith.constant 16 : index
      %149 = vector.load %arg8[%c0_53, %c16_54] : memref<4x166xf32, #tpu.memory_space<vmem>>, vector<4x64xf32>
      %150 = vector.broadcast %95 : f32 to vector<4x64xf32>
      %151 = arith.mulf %150, %149 : vector<4x64xf32>
      %152 = arith.addf %148, %151 : vector<4x64xf32>
      %153 = arith.addf %145, %152 : vector<4x64xf32>
      %c0_55 = arith.constant 0 : index
      %c32_56 = arith.constant 32 : index
      %154 = vector.load %arg7[%c0_55, %c32_56] : memref<4x166xf32, #tpu.memory_space<vmem>>, vector<4x64xf32>
      %155 = vector.broadcast %53 : f32 to vector<4x64xf32>
      %156 = arith.mulf %155, %154 : vector<4x64xf32>
      %c0_57 = arith.constant 0 : index
      %c32_58 = arith.constant 32 : index
      %157 = vector.load %arg8[%c0_57, %c32_58] : memref<4x166xf32, #tpu.memory_space<vmem>>, vector<4x64xf32>
      %158 = vector.broadcast %102 : f32 to vector<4x64xf32>
      %159 = arith.mulf %158, %157 : vector<4x64xf32>
      %160 = arith.addf %156, %159 : vector<4x64xf32>
      %161 = arith.addf %153, %160 : vector<4x64xf32>
      %c0_59 = arith.constant 0 : index
      %c48_60 = arith.constant 48 : index
      %162 = vector.load %arg7[%c0_59, %c48_60] : memref<4x166xf32, #tpu.memory_space<vmem>>, vector<4x64xf32>
      %163 = vector.broadcast %60 : f32 to vector<4x64xf32>
      %164 = arith.mulf %163, %162 : vector<4x64xf32>
      %c0_61 = arith.constant 0 : index
      %c48_62 = arith.constant 48 : index
      %165 = vector.load %arg8[%c0_61, %c48_62] : memref<4x166xf32, #tpu.memory_space<vmem>>, vector<4x64xf32>
      %166 = vector.broadcast %109 : f32 to vector<4x64xf32>
      %167 = arith.mulf %166, %165 : vector<4x64xf32>
      %168 = arith.addf %164, %167 : vector<4x64xf32>
      %169 = arith.addf %161, %168 : vector<4x64xf32>
      %c0_63 = arith.constant 0 : index
      %c64_64 = arith.constant 64 : index
      %170 = vector.load %arg7[%c0_63, %c64_64] : memref<4x166xf32, #tpu.memory_space<vmem>>, vector<4x64xf32>
      %171 = vector.broadcast %67 : f32 to vector<4x64xf32>
      %172 = arith.mulf %171, %170 : vector<4x64xf32>
      %c0_65 = arith.constant 0 : index
      %c64_66 = arith.constant 64 : index
      %173 = vector.load %arg8[%c0_65, %c64_66] : memref<4x166xf32, #tpu.memory_space<vmem>>, vector<4x64xf32>
      %174 = vector.broadcast %116 : f32 to vector<4x64xf32>
      %175 = arith.mulf %174, %173 : vector<4x64xf32>
      %176 = arith.addf %172, %175 : vector<4x64xf32>
      %177 = arith.addf %169, %176 : vector<4x64xf32>
      %c0_67 = arith.constant 0 : index
      %c80_68 = arith.constant 80 : index
      %178 = vector.load %arg7[%c0_67, %c80_68] : memref<4x166xf32, #tpu.memory_space<vmem>>, vector<4x64xf32>
      %179 = vector.broadcast %74 : f32 to vector<4x64xf32>
      %180 = arith.mulf %179, %178 : vector<4x64xf32>
      %c0_69 = arith.constant 0 : index
      %c80_70 = arith.constant 80 : index
      %181 = vector.load %arg8[%c0_69, %c80_70] : memref<4x166xf32, #tpu.memory_space<vmem>>, vector<4x64xf32>
      %182 = vector.broadcast %123 : f32 to vector<4x64xf32>
      %183 = arith.mulf %182, %181 : vector<4x64xf32>
      %184 = arith.addf %180, %183 : vector<4x64xf32>
      %185 = arith.addf %177, %184 : vector<4x64xf32>
      %c0_71 = arith.constant 0 : index
      %c96_72 = arith.constant 96 : index
      %186 = vector.load %arg7[%c0_71, %c96_72] : memref<4x166xf32, #tpu.memory_space<vmem>>, vector<4x64xf32>
      %187 = vector.broadcast %81 : f32 to vector<4x64xf32>
      %188 = arith.mulf %187, %186 : vector<4x64xf32>
      %c0_73 = arith.constant 0 : index
      %c96_74 = arith.constant 96 : index
      %189 = vector.load %arg8[%c0_73, %c96_74] : memref<4x166xf32, #tpu.memory_space<vmem>>, vector<4x64xf32>
      %190 = vector.broadcast %130 : f32 to vector<4x64xf32>
      %191 = arith.mulf %190, %189 : vector<4x64xf32>
      %192 = arith.addf %188, %191 : vector<4x64xf32>
      %193 = arith.addf %185, %192 : vector<4x64xf32>
      %c3_i32 = arith.constant 3 : i32
      %194 = vector.broadcast %c3_i32 : i32 to vector<4x64xi32>
      %195 = arith.cmpi sge, %137, %194 : vector<4x64xi32>
      %cst_75 = arith.constant 0.000000e+00 : f32
      %196 = vector.broadcast %cst_75 : f32 to vector<4x64xf32>
      %197 = arith.select %195, %193, %196 : vector<4x64xi1>, vector<4x64xf32>
      %198 = arith.addf %138, %197 : vector<4x64xf32>
      %c0_76 = arith.constant 0 : index
      %c1_77 = arith.constant 1 : index
      %199 = vector.load %arg7[%c0_76, %c1_77] : memref<4x166xf32, #tpu.memory_space<vmem>>, vector<4x64xf32>
      %200 = vector.broadcast %40 : f32 to vector<4x64xf32>
      %201 = arith.mulf %200, %199 : vector<4x64xf32>
      %c0_78 = arith.constant 0 : index
      %c1_79 = arith.constant 1 : index
      %202 = vector.load %arg8[%c0_78, %c1_79] : memref<4x166xf32, #tpu.memory_space<vmem>>, vector<4x64xf32>
      %203 = vector.broadcast %89 : f32 to vector<4x64xf32>
      %204 = arith.mulf %203, %202 : vector<4x64xf32>
      %205 = arith.addf %201, %204 : vector<4x64xf32>
      %c0_80 = arith.constant 0 : index
      %c17_81 = arith.constant 17 : index
      %206 = vector.load %arg7[%c0_80, %c17_81] : memref<4x166xf32, #tpu.memory_space<vmem>>, vector<4x64xf32>
      %207 = vector.broadcast %47 : f32 to vector<4x64xf32>
      %208 = arith.mulf %207, %206 : vector<4x64xf32>
      %c0_82 = arith.constant 0 : index
      %c17_83 = arith.constant 17 : index
      %209 = vector.load %arg8[%c0_82, %c17_83] : memref<4x166xf32, #tpu.memory_space<vmem>>, vector<4x64xf32>
      %210 = vector.broadcast %96 : f32 to vector<4x64xf32>
      %211 = arith.mulf %210, %209 : vector<4x64xf32>
      %212 = arith.addf %208, %211 : vector<4x64xf32>
      %213 = arith.addf %205, %212 : vector<4x64xf32>
      %c0_84 = arith.constant 0 : index
      %c33_85 = arith.constant 33 : index
      %214 = vector.load %arg7[%c0_84, %c33_85] : memref<4x166xf32, #tpu.memory_space<vmem>>, vector<4x64xf32>
      %215 = vector.broadcast %54 : f32 to vector<4x64xf32>
      %216 = arith.mulf %215, %214 : vector<4x64xf32>
      %c0_86 = arith.constant 0 : index
      %c33_87 = arith.constant 33 : index
      %217 = vector.load %arg8[%c0_86, %c33_87] : memref<4x166xf32, #tpu.memory_space<vmem>>, vector<4x64xf32>
      %218 = vector.broadcast %103 : f32 to vector<4x64xf32>
      %219 = arith.mulf %218, %217 : vector<4x64xf32>
      %220 = arith.addf %216, %219 : vector<4x64xf32>
      %221 = arith.addf %213, %220 : vector<4x64xf32>
      %c0_88 = arith.constant 0 : index
      %c49_89 = arith.constant 49 : index
      %222 = vector.load %arg7[%c0_88, %c49_89] : memref<4x166xf32, #tpu.memory_space<vmem>>, vector<4x64xf32>
      %223 = vector.broadcast %61 : f32 to vector<4x64xf32>
      %224 = arith.mulf %223, %222 : vector<4x64xf32>
      %c0_90 = arith.constant 0 : index
      %c49_91 = arith.constant 49 : index
      %225 = vector.load %arg8[%c0_90, %c49_91] : memref<4x166xf32, #tpu.memory_space<vmem>>, vector<4x64xf32>
      %226 = vector.broadcast %110 : f32 to vector<4x64xf32>
      %227 = arith.mulf %226, %225 : vector<4x64xf32>
      %228 = arith.addf %224, %227 : vector<4x64xf32>
      %229 = arith.addf %221, %228 : vector<4x64xf32>
      %c0_92 = arith.constant 0 : index
      %c65_93 = arith.constant 65 : index
      %230 = vector.load %arg7[%c0_92, %c65_93] : memref<4x166xf32, #tpu.memory_space<vmem>>, vector<4x64xf32>
      %231 = vector.broadcast %68 : f32 to vector<4x64xf32>
      %232 = arith.mulf %231, %230 : vector<4x64xf32>
      %c0_94 = arith.constant 0 : index
      %c65_95 = arith.constant 65 : index
      %233 = vector.load %arg8[%c0_94, %c65_95] : memref<4x166xf32, #tpu.memory_space<vmem>>, vector<4x64xf32>
      %234 = vector.broadcast %117 : f32 to vector<4x64xf32>
      %235 = arith.mulf %234, %233 : vector<4x64xf32>
      %236 = arith.addf %232, %235 : vector<4x64xf32>
      %237 = arith.addf %229, %236 : vector<4x64xf32>
      %c0_96 = arith.constant 0 : index
      %c81_97 = arith.constant 81 : index
      %238 = vector.load %arg7[%c0_96, %c81_97] : memref<4x166xf32, #tpu.memory_space<vmem>>, vector<4x64xf32>
      %239 = vector.broadcast %75 : f32 to vector<4x64xf32>
      %240 = arith.mulf %239, %238 : vector<4x64xf32>
      %c0_98 = arith.constant 0 : index
      %c81_99 = arith.constant 81 : index
      %241 = vector.load %arg8[%c0_98, %c81_99] : memref<4x166xf32, #tpu.memory_space<vmem>>, vector<4x64xf32>
      %242 = vector.broadcast %124 : f32 to vector<4x64xf32>
      %243 = arith.mulf %242, %241 : vector<4x64xf32>
      %244 = arith.addf %240, %243 : vector<4x64xf32>
      %245 = arith.addf %237, %244 : vector<4x64xf32>
      %c0_100 = arith.constant 0 : index
      %c97_101 = arith.constant 97 : index
      %246 = vector.load %arg7[%c0_100, %c97_101] : memref<4x166xf32, #tpu.memory_space<vmem>>, vector<4x64xf32>
      %247 = vector.broadcast %82 : f32 to vector<4x64xf32>
      %248 = arith.mulf %247, %246 : vector<4x64xf32>
      %c0_102 = arith.constant 0 : index
      %c97_103 = arith.constant 97 : index
      %249 = vector.load %arg8[%c0_102, %c97_103] : memref<4x166xf32, #tpu.memory_space<vmem>>, vector<4x64xf32>
      %250 = vector.broadcast %131 : f32 to vector<4x64xf32>
      %251 = arith.mulf %250, %249 : vector<4x64xf32>
      %252 = arith.addf %248, %251 : vector<4x64xf32>
      %253 = arith.addf %245, %252 : vector<4x64xf32>
      %c2_i32 = arith.constant 2 : i32
      %254 = vector.broadcast %c2_i32 : i32 to vector<4x64xi32>
      %255 = arith.cmpi sge, %137, %254 : vector<4x64xi32>
      %cst_104 = arith.constant 0.000000e+00 : f32
      %256 = vector.broadcast %cst_104 : f32 to vector<4x64xf32>
      %257 = arith.select %255, %253, %256 : vector<4x64xi1>, vector<4x64xf32>
      %258 = arith.addf %198, %257 : vector<4x64xf32>
      %c0_105 = arith.constant 0 : index
      %c2_106 = arith.constant 2 : index
      %259 = vector.load %arg7[%c0_105, %c2_106] : memref<4x166xf32, #tpu.memory_space<vmem>>, vector<4x64xf32>
      %260 = vector.broadcast %41 : f32 to vector<4x64xf32>
      %261 = arith.mulf %260, %259 : vector<4x64xf32>
      %c0_107 = arith.constant 0 : index
      %c2_108 = arith.constant 2 : index
      %262 = vector.load %arg8[%c0_107, %c2_108] : memref<4x166xf32, #tpu.memory_space<vmem>>, vector<4x64xf32>
      %263 = vector.broadcast %90 : f32 to vector<4x64xf32>
      %264 = arith.mulf %263, %262 : vector<4x64xf32>
      %265 = arith.addf %261, %264 : vector<4x64xf32>
      %c0_109 = arith.constant 0 : index
      %c18_110 = arith.constant 18 : index
      %266 = vector.load %arg7[%c0_109, %c18_110] : memref<4x166xf32, #tpu.memory_space<vmem>>, vector<4x64xf32>
      %267 = vector.broadcast %48 : f32 to vector<4x64xf32>
      %268 = arith.mulf %267, %266 : vector<4x64xf32>
      %c0_111 = arith.constant 0 : index
      %c18_112 = arith.constant 18 : index
      %269 = vector.load %arg8[%c0_111, %c18_112] : memref<4x166xf32, #tpu.memory_space<vmem>>, vector<4x64xf32>
      %270 = vector.broadcast %97 : f32 to vector<4x64xf32>
      %271 = arith.mulf %270, %269 : vector<4x64xf32>
      %272 = arith.addf %268, %271 : vector<4x64xf32>
      %273 = arith.addf %265, %272 : vector<4x64xf32>
      %c0_113 = arith.constant 0 : index
      %c34_114 = arith.constant 34 : index
      %274 = vector.load %arg7[%c0_113, %c34_114] : memref<4x166xf32, #tpu.memory_space<vmem>>, vector<4x64xf32>
      %275 = vector.broadcast %55 : f32 to vector<4x64xf32>
      %276 = arith.mulf %275, %274 : vector<4x64xf32>
      %c0_115 = arith.constant 0 : index
      %c34_116 = arith.constant 34 : index
      %277 = vector.load %arg8[%c0_115, %c34_116] : memref<4x166xf32, #tpu.memory_space<vmem>>, vector<4x64xf32>
      %278 = vector.broadcast %104 : f32 to vector<4x64xf32>
      %279 = arith.mulf %278, %277 : vector<4x64xf32>
      %280 = arith.addf %276, %279 : vector<4x64xf32>
      %281 = arith.addf %273, %280 : vector<4x64xf32>
      %c0_117 = arith.constant 0 : index
      %c50_118 = arith.constant 50 : index
      %282 = vector.load %arg7[%c0_117, %c50_118] : memref<4x166xf32, #tpu.memory_space<vmem>>, vector<4x64xf32>
      %283 = vector.broadcast %62 : f32 to vector<4x64xf32>
      %284 = arith.mulf %283, %282 : vector<4x64xf32>
      %c0_119 = arith.constant 0 : index
      %c50_120 = arith.constant 50 : index
      %285 = vector.load %arg8[%c0_119, %c50_120] : memref<4x166xf32, #tpu.memory_space<vmem>>, vector<4x64xf32>
      %286 = vector.broadcast %111 : f32 to vector<4x64xf32>
      %287 = arith.mulf %286, %285 : vector<4x64xf32>
      %288 = arith.addf %284, %287 : vector<4x64xf32>
      %289 = arith.addf %281, %288 : vector<4x64xf32>
      %c0_121 = arith.constant 0 : index
      %c66_122 = arith.constant 66 : index
      %290 = vector.load %arg7[%c0_121, %c66_122] : memref<4x166xf32, #tpu.memory_space<vmem>>, vector<4x64xf32>
      %291 = vector.broadcast %69 : f32 to vector<4x64xf32>
      %292 = arith.mulf %291, %290 : vector<4x64xf32>
      %c0_123 = arith.constant 0 : index
      %c66_124 = arith.constant 66 : index
      %293 = vector.load %arg8[%c0_123, %c66_124] : memref<4x166xf32, #tpu.memory_space<vmem>>, vector<4x64xf32>
      %294 = vector.broadcast %118 : f32 to vector<4x64xf32>
      %295 = arith.mulf %294, %293 : vector<4x64xf32>
      %296 = arith.addf %292, %295 : vector<4x64xf32>
      %297 = arith.addf %289, %296 : vector<4x64xf32>
      %c0_125 = arith.constant 0 : index
      %c82_126 = arith.constant 82 : index
      %298 = vector.load %arg7[%c0_125, %c82_126] : memref<4x166xf32, #tpu.memory_space<vmem>>, vector<4x64xf32>
      %299 = vector.broadcast %76 : f32 to vector<4x64xf32>
      %300 = arith.mulf %299, %298 : vector<4x64xf32>
      %c0_127 = arith.constant 0 : index
      %c82_128 = arith.constant 82 : index
      %301 = vector.load %arg8[%c0_127, %c82_128] : memref<4x166xf32, #tpu.memory_space<vmem>>, vector<4x64xf32>
      %302 = vector.broadcast %125 : f32 to vector<4x64xf32>
      %303 = arith.mulf %302, %301 : vector<4x64xf32>
      %304 = arith.addf %300, %303 : vector<4x64xf32>
      %305 = arith.addf %297, %304 : vector<4x64xf32>
      %c0_129 = arith.constant 0 : index
      %c98 = arith.constant 98 : index
      %306 = vector.load %arg7[%c0_129, %c98] : memref<4x166xf32, #tpu.memory_space<vmem>>, vector<4x64xf32>
      %307 = vector.broadcast %83 : f32 to vector<4x64xf32>
      %308 = arith.mulf %307, %306 : vector<4x64xf32>
      %c0_130 = arith.constant 0 : index
      %c98_131 = arith.constant 98 : index
      %309 = vector.load %arg8[%c0_130, %c98_131] : memref<4x166xf32, #tpu.memory_space<vmem>>, vector<4x64xf32>
      %310 = vector.broadcast %132 : f32 to vector<4x64xf32>
      %311 = arith.mulf %310, %309 : vector<4x64xf32>
      %312 = arith.addf %308, %311 : vector<4x64xf32>
      %313 = arith.addf %305, %312 : vector<4x64xf32>
      %c1_i32 = arith.constant 1 : i32
      %314 = vector.broadcast %c1_i32 : i32 to vector<4x64xi32>
      %315 = arith.cmpi sge, %137, %314 : vector<4x64xi32>
      %cst_132 = arith.constant 0.000000e+00 : f32
      %316 = vector.broadcast %cst_132 : f32 to vector<4x64xf32>
      %317 = arith.select %315, %313, %316 : vector<4x64xi1>, vector<4x64xf32>
      %318 = arith.addf %258, %317 : vector<4x64xf32>
      %c0_133 = arith.constant 0 : index
      %c3_134 = arith.constant 3 : index
      %319 = vector.load %arg7[%c0_133, %c3_134] : memref<4x166xf32, #tpu.memory_space<vmem>>, vector<4x64xf32>
      %320 = vector.broadcast %42 : f32 to vector<4x64xf32>
      %321 = arith.mulf %320, %319 : vector<4x64xf32>
      %c0_135 = arith.constant 0 : index
      %c3_136 = arith.constant 3 : index
      %322 = vector.load %arg8[%c0_135, %c3_136] : memref<4x166xf32, #tpu.memory_space<vmem>>, vector<4x64xf32>
      %323 = vector.broadcast %91 : f32 to vector<4x64xf32>
      %324 = arith.mulf %323, %322 : vector<4x64xf32>
      %325 = arith.addf %321, %324 : vector<4x64xf32>
      %c0_137 = arith.constant 0 : index
      %c19_138 = arith.constant 19 : index
      %326 = vector.load %arg7[%c0_137, %c19_138] : memref<4x166xf32, #tpu.memory_space<vmem>>, vector<4x64xf32>
      %327 = vector.broadcast %49 : f32 to vector<4x64xf32>
      %328 = arith.mulf %327, %326 : vector<4x64xf32>
      %c0_139 = arith.constant 0 : index
      %c19_140 = arith.constant 19 : index
      %329 = vector.load %arg8[%c0_139, %c19_140] : memref<4x166xf32, #tpu.memory_space<vmem>>, vector<4x64xf32>
      %330 = vector.broadcast %98 : f32 to vector<4x64xf32>
      %331 = arith.mulf %330, %329 : vector<4x64xf32>
      %332 = arith.addf %328, %331 : vector<4x64xf32>
      %333 = arith.addf %325, %332 : vector<4x64xf32>
      %c0_141 = arith.constant 0 : index
      %c35_142 = arith.constant 35 : index
      %334 = vector.load %arg7[%c0_141, %c35_142] : memref<4x166xf32, #tpu.memory_space<vmem>>, vector<4x64xf32>
      %335 = vector.broadcast %56 : f32 to vector<4x64xf32>
      %336 = arith.mulf %335, %334 : vector<4x64xf32>
      %c0_143 = arith.constant 0 : index
      %c35_144 = arith.constant 35 : index
      %337 = vector.load %arg8[%c0_143, %c35_144] : memref<4x166xf32, #tpu.memory_space<vmem>>, vector<4x64xf32>
      %338 = vector.broadcast %105 : f32 to vector<4x64xf32>
      %339 = arith.mulf %338, %337 : vector<4x64xf32>
      %340 = arith.addf %336, %339 : vector<4x64xf32>
      %341 = arith.addf %333, %340 : vector<4x64xf32>
      %c0_145 = arith.constant 0 : index
      %c51_146 = arith.constant 51 : index
      %342 = vector.load %arg7[%c0_145, %c51_146] : memref<4x166xf32, #tpu.memory_space<vmem>>, vector<4x64xf32>
      %343 = vector.broadcast %63 : f32 to vector<4x64xf32>
      %344 = arith.mulf %343, %342 : vector<4x64xf32>
      %c0_147 = arith.constant 0 : index
      %c51_148 = arith.constant 51 : index
      %345 = vector.load %arg8[%c0_147, %c51_148] : memref<4x166xf32, #tpu.memory_space<vmem>>, vector<4x64xf32>
      %346 = vector.broadcast %112 : f32 to vector<4x64xf32>
      %347 = arith.mulf %346, %345 : vector<4x64xf32>
      %348 = arith.addf %344, %347 : vector<4x64xf32>
      %349 = arith.addf %341, %348 : vector<4x64xf32>
      %c0_149 = arith.constant 0 : index
      %c67_150 = arith.constant 67 : index
      %350 = vector.load %arg7[%c0_149, %c67_150] : memref<4x166xf32, #tpu.memory_space<vmem>>, vector<4x64xf32>
      %351 = vector.broadcast %70 : f32 to vector<4x64xf32>
      %352 = arith.mulf %351, %350 : vector<4x64xf32>
      %c0_151 = arith.constant 0 : index
      %c67_152 = arith.constant 67 : index
      %353 = vector.load %arg8[%c0_151, %c67_152] : memref<4x166xf32, #tpu.memory_space<vmem>>, vector<4x64xf32>
      %354 = vector.broadcast %119 : f32 to vector<4x64xf32>
      %355 = arith.mulf %354, %353 : vector<4x64xf32>
      %356 = arith.addf %352, %355 : vector<4x64xf32>
      %357 = arith.addf %349, %356 : vector<4x64xf32>
      %c0_153 = arith.constant 0 : index
      %c83_154 = arith.constant 83 : index
      %358 = vector.load %arg7[%c0_153, %c83_154] : memref<4x166xf32, #tpu.memory_space<vmem>>, vector<4x64xf32>
      %359 = vector.broadcast %77 : f32 to vector<4x64xf32>
      %360 = arith.mulf %359, %358 : vector<4x64xf32>
      %c0_155 = arith.constant 0 : index
      %c83_156 = arith.constant 83 : index
      %361 = vector.load %arg8[%c0_155, %c83_156] : memref<4x166xf32, #tpu.memory_space<vmem>>, vector<4x64xf32>
      %362 = vector.broadcast %126 : f32 to vector<4x64xf32>
      %363 = arith.mulf %362, %361 : vector<4x64xf32>
      %364 = arith.addf %360, %363 : vector<4x64xf32>
      %365 = arith.addf %357, %364 : vector<4x64xf32>
      %c0_157 = arith.constant 0 : index
      %c99 = arith.constant 99 : index
      %366 = vector.load %arg7[%c0_157, %c99] : memref<4x166xf32, #tpu.memory_space<vmem>>, vector<4x64xf32>
      %367 = vector.broadcast %84 : f32 to vector<4x64xf32>
      %368 = arith.mulf %367, %366 : vector<4x64xf32>
      %c0_158 = arith.constant 0 : index
      %c99_159 = arith.constant 99 : index
      %369 = vector.load %arg8[%c0_158, %c99_159] : memref<4x166xf32, #tpu.memory_space<vmem>>, vector<4x64xf32>
      %370 = vector.broadcast %133 : f32 to vector<4x64xf32>
      %371 = arith.mulf %370, %369 : vector<4x64xf32>
      %372 = arith.addf %368, %371 : vector<4x64xf32>
      %373 = arith.addf %365, %372 : vector<4x64xf32>
      %374 = arith.addf %318, %373 : vector<4x64xf32>
      %c0_160 = arith.constant 0 : index
      %c4_161 = arith.constant 4 : index
      %375 = vector.load %arg7[%c0_160, %c4_161] : memref<4x166xf32, #tpu.memory_space<vmem>>, vector<4x64xf32>
      %376 = vector.broadcast %43 : f32 to vector<4x64xf32>
      %377 = arith.mulf %376, %375 : vector<4x64xf32>
      %c0_162 = arith.constant 0 : index
      %c4_163 = arith.constant 4 : index
      %378 = vector.load %arg8[%c0_162, %c4_163] : memref<4x166xf32, #tpu.memory_space<vmem>>, vector<4x64xf32>
      %379 = vector.broadcast %92 : f32 to vector<4x64xf32>
      %380 = arith.mulf %379, %378 : vector<4x64xf32>
      %381 = arith.addf %377, %380 : vector<4x64xf32>
      %c0_164 = arith.constant 0 : index
      %c20_165 = arith.constant 20 : index
      %382 = vector.load %arg7[%c0_164, %c20_165] : memref<4x166xf32, #tpu.memory_space<vmem>>, vector<4x64xf32>
      %383 = vector.broadcast %50 : f32 to vector<4x64xf32>
      %384 = arith.mulf %383, %382 : vector<4x64xf32>
      %c0_166 = arith.constant 0 : index
      %c20_167 = arith.constant 20 : index
      %385 = vector.load %arg8[%c0_166, %c20_167] : memref<4x166xf32, #tpu.memory_space<vmem>>, vector<4x64xf32>
      %386 = vector.broadcast %99 : f32 to vector<4x64xf32>
      %387 = arith.mulf %386, %385 : vector<4x64xf32>
      %388 = arith.addf %384, %387 : vector<4x64xf32>
      %389 = arith.addf %381, %388 : vector<4x64xf32>
      %c0_168 = arith.constant 0 : index
      %c36_169 = arith.constant 36 : index
      %390 = vector.load %arg7[%c0_168, %c36_169] : memref<4x166xf32, #tpu.memory_space<vmem>>, vector<4x64xf32>
      %391 = vector.broadcast %57 : f32 to vector<4x64xf32>
      %392 = arith.mulf %391, %390 : vector<4x64xf32>
      %c0_170 = arith.constant 0 : index
      %c36_171 = arith.constant 36 : index
      %393 = vector.load %arg8[%c0_170, %c36_171] : memref<4x166xf32, #tpu.memory_space<vmem>>, vector<4x64xf32>
      %394 = vector.broadcast %106 : f32 to vector<4x64xf32>
      %395 = arith.mulf %394, %393 : vector<4x64xf32>
      %396 = arith.addf %392, %395 : vector<4x64xf32>
      %397 = arith.addf %389, %396 : vector<4x64xf32>
      %c0_172 = arith.constant 0 : index
      %c52_173 = arith.constant 52 : index
      %398 = vector.load %arg7[%c0_172, %c52_173] : memref<4x166xf32, #tpu.memory_space<vmem>>, vector<4x64xf32>
      %399 = vector.broadcast %64 : f32 to vector<4x64xf32>
      %400 = arith.mulf %399, %398 : vector<4x64xf32>
      %c0_174 = arith.constant 0 : index
      %c52_175 = arith.constant 52 : index
      %401 = vector.load %arg8[%c0_174, %c52_175] : memref<4x166xf32, #tpu.memory_space<vmem>>, vector<4x64xf32>
      %402 = vector.broadcast %113 : f32 to vector<4x64xf32>
      %403 = arith.mulf %402, %401 : vector<4x64xf32>
      %404 = arith.addf %400, %403 : vector<4x64xf32>
      %405 = arith.addf %397, %404 : vector<4x64xf32>
      %c0_176 = arith.constant 0 : index
      %c68_177 = arith.constant 68 : index
      %406 = vector.load %arg7[%c0_176, %c68_177] : memref<4x166xf32, #tpu.memory_space<vmem>>, vector<4x64xf32>
      %407 = vector.broadcast %71 : f32 to vector<4x64xf32>
      %408 = arith.mulf %407, %406 : vector<4x64xf32>
      %c0_178 = arith.constant 0 : index
      %c68_179 = arith.constant 68 : index
      %409 = vector.load %arg8[%c0_178, %c68_179] : memref<4x166xf32, #tpu.memory_space<vmem>>, vector<4x64xf32>
      %410 = vector.broadcast %120 : f32 to vector<4x64xf32>
      %411 = arith.mulf %410, %409 : vector<4x64xf32>
      %412 = arith.addf %408, %411 : vector<4x64xf32>
      %413 = arith.addf %405, %412 : vector<4x64xf32>
      %c0_180 = arith.constant 0 : index
      %c84_181 = arith.constant 84 : index
      %414 = vector.load %arg7[%c0_180, %c84_181] : memref<4x166xf32, #tpu.memory_space<vmem>>, vector<4x64xf32>
      %415 = vector.broadcast %78 : f32 to vector<4x64xf32>
      %416 = arith.mulf %415, %414 : vector<4x64xf32>
      %c0_182 = arith.constant 0 : index
      %c84_183 = arith.constant 84 : index
      %417 = vector.load %arg8[%c0_182, %c84_183] : memref<4x166xf32, #tpu.memory_space<vmem>>, vector<4x64xf32>
      %418 = vector.broadcast %127 : f32 to vector<4x64xf32>
      %419 = arith.mulf %418, %417 : vector<4x64xf32>
      %420 = arith.addf %416, %419 : vector<4x64xf32>
      %421 = arith.addf %413, %420 : vector<4x64xf32>
      %c0_184 = arith.constant 0 : index
      %c100 = arith.constant 100 : index
      %422 = vector.load %arg7[%c0_184, %c100] : memref<4x166xf32, #tpu.memory_space<vmem>>, vector<4x64xf32>
      %423 = vector.broadcast %85 : f32 to vector<4x64xf32>
      %424 = arith.mulf %423, %422 : vector<4x64xf32>
      %c0_185 = arith.constant 0 : index
      %c100_186 = arith.constant 100 : index
      %425 = vector.load %arg8[%c0_185, %c100_186] : memref<4x166xf32, #tpu.memory_space<vmem>>, vector<4x64xf32>
      %426 = vector.broadcast %134 : f32 to vector<4x64xf32>
      %427 = arith.mulf %426, %425 : vector<4x64xf32>
      %428 = arith.addf %424, %427 : vector<4x64xf32>
      %429 = arith.addf %421, %428 : vector<4x64xf32>
      %c15_i32 = arith.constant 15 : i32
      %430 = vector.broadcast %c15_i32 : i32 to vector<4x64xi32>
      %431 = arith.cmpi slt, %137, %430 : vector<4x64xi32>
      %cst_187 = arith.constant 0.000000e+00 : f32
      %432 = vector.broadcast %cst_187 : f32 to vector<4x64xf32>
      %433 = arith.select %431, %429, %432 : vector<4x64xi1>, vector<4x64xf32>
      %434 = arith.addf %374, %433 : vector<4x64xf32>
      %c0_188 = arith.constant 0 : index
      %c5_189 = arith.constant 5 : index
      %435 = vector.load %arg7[%c0_188, %c5_189] : memref<4x166xf32, #tpu.memory_space<vmem>>, vector<4x64xf32>
      %436 = vector.broadcast %44 : f32 to vector<4x64xf32>
      %437 = arith.mulf %436, %435 : vector<4x64xf32>
      %c0_190 = arith.constant 0 : index
      %c5_191 = arith.constant 5 : index
      %438 = vector.load %arg8[%c0_190, %c5_191] : memref<4x166xf32, #tpu.memory_space<vmem>>, vector<4x64xf32>
      %439 = vector.broadcast %93 : f32 to vector<4x64xf32>
      %440 = arith.mulf %439, %438 : vector<4x64xf32>
      %441 = arith.addf %437, %440 : vector<4x64xf32>
      %c0_192 = arith.constant 0 : index
      %c21_193 = arith.constant 21 : index
      %442 = vector.load %arg7[%c0_192, %c21_193] : memref<4x166xf32, #tpu.memory_space<vmem>>, vector<4x64xf32>
      %443 = vector.broadcast %51 : f32 to vector<4x64xf32>
      %444 = arith.mulf %443, %442 : vector<4x64xf32>
      %c0_194 = arith.constant 0 : index
      %c21_195 = arith.constant 21 : index
      %445 = vector.load %arg8[%c0_194, %c21_195] : memref<4x166xf32, #tpu.memory_space<vmem>>, vector<4x64xf32>
      %446 = vector.broadcast %100 : f32 to vector<4x64xf32>
      %447 = arith.mulf %446, %445 : vector<4x64xf32>
      %448 = arith.addf %444, %447 : vector<4x64xf32>
      %449 = arith.addf %441, %448 : vector<4x64xf32>
      %c0_196 = arith.constant 0 : index
      %c37_197 = arith.constant 37 : index
      %450 = vector.load %arg7[%c0_196, %c37_197] : memref<4x166xf32, #tpu.memory_space<vmem>>, vector<4x64xf32>
      %451 = vector.broadcast %58 : f32 to vector<4x64xf32>
      %452 = arith.mulf %451, %450 : vector<4x64xf32>
      %c0_198 = arith.constant 0 : index
      %c37_199 = arith.constant 37 : index
      %453 = vector.load %arg8[%c0_198, %c37_199] : memref<4x166xf32, #tpu.memory_space<vmem>>, vector<4x64xf32>
      %454 = vector.broadcast %107 : f32 to vector<4x64xf32>
      %455 = arith.mulf %454, %453 : vector<4x64xf32>
      %456 = arith.addf %452, %455 : vector<4x64xf32>
      %457 = arith.addf %449, %456 : vector<4x64xf32>
      %c0_200 = arith.constant 0 : index
      %c53_201 = arith.constant 53 : index
      %458 = vector.load %arg7[%c0_200, %c53_201] : memref<4x166xf32, #tpu.memory_space<vmem>>, vector<4x64xf32>
      %459 = vector.broadcast %65 : f32 to vector<4x64xf32>
      %460 = arith.mulf %459, %458 : vector<4x64xf32>
      %c0_202 = arith.constant 0 : index
      %c53_203 = arith.constant 53 : index
      %461 = vector.load %arg8[%c0_202, %c53_203] : memref<4x166xf32, #tpu.memory_space<vmem>>, vector<4x64xf32>
      %462 = vector.broadcast %114 : f32 to vector<4x64xf32>
      %463 = arith.mulf %462, %461 : vector<4x64xf32>
      %464 = arith.addf %460, %463 : vector<4x64xf32>
      %465 = arith.addf %457, %464 : vector<4x64xf32>
      %c0_204 = arith.constant 0 : index
      %c69_205 = arith.constant 69 : index
      %466 = vector.load %arg7[%c0_204, %c69_205] : memref<4x166xf32, #tpu.memory_space<vmem>>, vector<4x64xf32>
      %467 = vector.broadcast %72 : f32 to vector<4x64xf32>
      %468 = arith.mulf %467, %466 : vector<4x64xf32>
      %c0_206 = arith.constant 0 : index
      %c69_207 = arith.constant 69 : index
      %469 = vector.load %arg8[%c0_206, %c69_207] : memref<4x166xf32, #tpu.memory_space<vmem>>, vector<4x64xf32>
      %470 = vector.broadcast %121 : f32 to vector<4x64xf32>
      %471 = arith.mulf %470, %469 : vector<4x64xf32>
      %472 = arith.addf %468, %471 : vector<4x64xf32>
      %473 = arith.addf %465, %472 : vector<4x64xf32>
      %c0_208 = arith.constant 0 : index
      %c85_209 = arith.constant 85 : index
      %474 = vector.load %arg7[%c0_208, %c85_209] : memref<4x166xf32, #tpu.memory_space<vmem>>, vector<4x64xf32>
      %475 = vector.broadcast %79 : f32 to vector<4x64xf32>
      %476 = arith.mulf %475, %474 : vector<4x64xf32>
      %c0_210 = arith.constant 0 : index
      %c85_211 = arith.constant 85 : index
      %477 = vector.load %arg8[%c0_210, %c85_211] : memref<4x166xf32, #tpu.memory_space<vmem>>, vector<4x64xf32>
      %478 = vector.broadcast %128 : f32 to vector<4x64xf32>
      %479 = arith.mulf %478, %477 : vector<4x64xf32>
      %480 = arith.addf %476, %479 : vector<4x64xf32>
      %481 = arith.addf %473, %480 : vector<4x64xf32>
      %c0_212 = arith.constant 0 : index
      %c101 = arith.constant 101 : index
      %482 = vector.load %arg7[%c0_212, %c101] : memref<4x166xf32, #tpu.memory_space<vmem>>, vector<4x64xf32>
      %483 = vector.broadcast %86 : f32 to vector<4x64xf32>
      %484 = arith.mulf %483, %482 : vector<4x64xf32>
      %c0_213 = arith.constant 0 : index
      %c101_214 = arith.constant 101 : index
      %485 = vector.load %arg8[%c0_213, %c101_214] : memref<4x166xf32, #tpu.memory_space<vmem>>, vector<4x64xf32>
      %486 = vector.broadcast %135 : f32 to vector<4x64xf32>
      %487 = arith.mulf %486, %485 : vector<4x64xf32>
      %488 = arith.addf %484, %487 : vector<4x64xf32>
      %489 = arith.addf %481, %488 : vector<4x64xf32>
      %c14_i32 = arith.constant 14 : i32
      %490 = vector.broadcast %c14_i32 : i32 to vector<4x64xi32>
      %491 = arith.cmpi slt, %137, %490 : vector<4x64xi32>
      %cst_215 = arith.constant 0.000000e+00 : f32
      %492 = vector.broadcast %cst_215 : f32 to vector<4x64xf32>
      %493 = arith.select %491, %489, %492 : vector<4x64xi1>, vector<4x64xf32>
      %494 = arith.addf %434, %493 : vector<4x64xf32>
      %c0_216 = arith.constant 0 : index
      %c6_217 = arith.constant 6 : index
      %495 = vector.load %arg7[%c0_216, %c6_217] : memref<4x166xf32, #tpu.memory_space<vmem>>, vector<4x64xf32>
      %496 = vector.broadcast %45 : f32 to vector<4x64xf32>
      %497 = arith.mulf %496, %495 : vector<4x64xf32>
      %c0_218 = arith.constant 0 : index
      %c6_219 = arith.constant 6 : index
      %498 = vector.load %arg8[%c0_218, %c6_219] : memref<4x166xf32, #tpu.memory_space<vmem>>, vector<4x64xf32>
      %499 = vector.broadcast %94 : f32 to vector<4x64xf32>
      %500 = arith.mulf %499, %498 : vector<4x64xf32>
      %501 = arith.addf %497, %500 : vector<4x64xf32>
      %c0_220 = arith.constant 0 : index
      %c22_221 = arith.constant 22 : index
      %502 = vector.load %arg7[%c0_220, %c22_221] : memref<4x166xf32, #tpu.memory_space<vmem>>, vector<4x64xf32>
      %503 = vector.broadcast %52 : f32 to vector<4x64xf32>
      %504 = arith.mulf %503, %502 : vector<4x64xf32>
      %c0_222 = arith.constant 0 : index
      %c22_223 = arith.constant 22 : index
      %505 = vector.load %arg8[%c0_222, %c22_223] : memref<4x166xf32, #tpu.memory_space<vmem>>, vector<4x64xf32>
      %506 = vector.broadcast %101 : f32 to vector<4x64xf32>
      %507 = arith.mulf %506, %505 : vector<4x64xf32>
      %508 = arith.addf %504, %507 : vector<4x64xf32>
      %509 = arith.addf %501, %508 : vector<4x64xf32>
      %c0_224 = arith.constant 0 : index
      %c38_225 = arith.constant 38 : index
      %510 = vector.load %arg7[%c0_224, %c38_225] : memref<4x166xf32, #tpu.memory_space<vmem>>, vector<4x64xf32>
      %511 = vector.broadcast %59 : f32 to vector<4x64xf32>
      %512 = arith.mulf %511, %510 : vector<4x64xf32>
      %c0_226 = arith.constant 0 : index
      %c38_227 = arith.constant 38 : index
      %513 = vector.load %arg8[%c0_226, %c38_227] : memref<4x166xf32, #tpu.memory_space<vmem>>, vector<4x64xf32>
      %514 = vector.broadcast %108 : f32 to vector<4x64xf32>
      %515 = arith.mulf %514, %513 : vector<4x64xf32>
      %516 = arith.addf %512, %515 : vector<4x64xf32>
      %517 = arith.addf %509, %516 : vector<4x64xf32>
      %c0_228 = arith.constant 0 : index
      %c54_229 = arith.constant 54 : index
      %518 = vector.load %arg7[%c0_228, %c54_229] : memref<4x166xf32, #tpu.memory_space<vmem>>, vector<4x64xf32>
      %519 = vector.broadcast %66 : f32 to vector<4x64xf32>
      %520 = arith.mulf %519, %518 : vector<4x64xf32>
      %c0_230 = arith.constant 0 : index
      %c54_231 = arith.constant 54 : index
      %521 = vector.load %arg8[%c0_230, %c54_231] : memref<4x166xf32, #tpu.memory_space<vmem>>, vector<4x64xf32>
      %522 = vector.broadcast %115 : f32 to vector<4x64xf32>
      %523 = arith.mulf %522, %521 : vector<4x64xf32>
      %524 = arith.addf %520, %523 : vector<4x64xf32>
      %525 = arith.addf %517, %524 : vector<4x64xf32>
      %c0_232 = arith.constant 0 : index
      %c70_233 = arith.constant 70 : index
      %526 = vector.load %arg7[%c0_232, %c70_233] : memref<4x166xf32, #tpu.memory_space<vmem>>, vector<4x64xf32>
      %527 = vector.broadcast %73 : f32 to vector<4x64xf32>
      %528 = arith.mulf %527, %526 : vector<4x64xf32>
      %c0_234 = arith.constant 0 : index
      %c70_235 = arith.constant 70 : index
      %529 = vector.load %arg8[%c0_234, %c70_235] : memref<4x166xf32, #tpu.memory_space<vmem>>, vector<4x64xf32>
      %530 = vector.broadcast %122 : f32 to vector<4x64xf32>
      %531 = arith.mulf %530, %529 : vector<4x64xf32>
      %532 = arith.addf %528, %531 : vector<4x64xf32>
      %533 = arith.addf %525, %532 : vector<4x64xf32>
      %c0_236 = arith.constant 0 : index
      %c86_237 = arith.constant 86 : index
      %534 = vector.load %arg7[%c0_236, %c86_237] : memref<4x166xf32, #tpu.memory_space<vmem>>, vector<4x64xf32>
      %535 = vector.broadcast %80 : f32 to vector<4x64xf32>
      %536 = arith.mulf %535, %534 : vector<4x64xf32>
      %c0_238 = arith.constant 0 : index
      %c86_239 = arith.constant 86 : index
      %537 = vector.load %arg8[%c0_238, %c86_239] : memref<4x166xf32, #tpu.memory_space<vmem>>, vector<4x64xf32>
      %538 = vector.broadcast %129 : f32 to vector<4x64xf32>
      %539 = arith.mulf %538, %537 : vector<4x64xf32>
      %540 = arith.addf %536, %539 : vector<4x64xf32>
      %541 = arith.addf %533, %540 : vector<4x64xf32>
      %c0_240 = arith.constant 0 : index
      %c102 = arith.constant 102 : index
      %542 = vector.load %arg7[%c0_240, %c102] : memref<4x166xf32, #tpu.memory_space<vmem>>, vector<4x64xf32>
      %543 = vector.broadcast %87 : f32 to vector<4x64xf32>
      %544 = arith.mulf %543, %542 : vector<4x64xf32>
      %c0_241 = arith.constant 0 : index
      %c102_242 = arith.constant 102 : index
      %545 = vector.load %arg8[%c0_241, %c102_242] : memref<4x166xf32, #tpu.memory_space<vmem>>, vector<4x64xf32>
      %546 = vector.broadcast %136 : f32 to vector<4x64xf32>
      %547 = arith.mulf %546, %545 : vector<4x64xf32>
      %548 = arith.addf %544, %547 : vector<4x64xf32>
      %549 = arith.addf %541, %548 : vector<4x64xf32>
      %c13_i32 = arith.constant 13 : i32
      %550 = vector.broadcast %c13_i32 : i32 to vector<4x64xi32>
      %551 = arith.cmpi slt, %137, %550 : vector<4x64xi32>
      %cst_243 = arith.constant 0.000000e+00 : f32
      %552 = vector.broadcast %cst_243 : f32 to vector<4x64xf32>
      %553 = arith.select %551, %549, %552 : vector<4x64xi1>, vector<4x64xf32>
      %554 = arith.addf %494, %553 : vector<4x64xf32>
      %555 = arith.negf %554 : vector<4x64xf32>
      %556 = math.exp %555 : vector<4x64xf32>
      %cst_244 = arith.constant 1.000000e+00 : f32
      %557 = vector.broadcast %cst_244 : f32 to vector<4x64xf32>
      %558 = arith.addf %557, %556 : vector<4x64xf32>
      %559 = arith.divf %557, %558 : vector<4x64xf32>
      %cst_245 = arith.constant 1.000000e+00 : f32
      %560 = vector.broadcast %cst_245 : f32 to vector<4x64xf32>
      %561 = arith.subf %560, %559 : vector<4x64xf32>
      %562 = vector.extract_strided_slice %561 {offsets = [0, 0], sizes = [1, 64], strides = [1, 1]} : vector<4x64xf32> to vector<1x64xf32>
      %563 = vector.shape_cast %562 : vector<1x64xf32> to vector<1x64xf32>
      %564 = vector.broadcast %563 : vector<1x64xf32> to vector<8x64xf32>
      %c0_246 = arith.constant 0 : index
      %c0_247 = arith.constant 0 : index
      %565 = vector.load %arg9[%c0_246, %c0_247] : memref<8x256xf32, #tpu.memory_space<vmem>>, vector<8x64xf32>
      tpu.vector_store %arg9[%c0_246, %c0_247], %564 {strides = array<i32>} : memref<8x256xf32, #tpu.memory_space<vmem>>, vector<8x64xf32>,
      %566 = vector.extract_strided_slice %561 {offsets = [1, 0], sizes = [1, 64], strides = [1, 1]} : vector<4x64xf32> to vector<1x64xf32>
      %567 = vector.shape_cast %566 : vector<1x64xf32> to vector<1x64xf32>
      %568 = vector.broadcast %567 : vector<1x64xf32> to vector<8x64xf32>
      %c0_248 = arith.constant 0 : index
      %c64_249 = arith.constant 64 : index
      %569 = vector.load %arg9[%c0_248, %c64_249] : memref<8x256xf32, #tpu.memory_space<vmem>>, vector<8x64xf32>
      tpu.vector_store %arg9[%c0_248, %c64_249], %568 {strides = array<i32>} : memref<8x256xf32, #tpu.memory_space<vmem>>, vector<8x64xf32>,
      %570 = vector.extract_strided_slice %561 {offsets = [2, 0], sizes = [1, 64], strides = [1, 1]} : vector<4x64xf32> to vector<1x64xf32>
      %571 = vector.shape_cast %570 : vector<1x64xf32> to vector<1x64xf32>
      %572 = vector.broadcast %571 : vector<1x64xf32> to vector<8x64xf32>
      %c0_250 = arith.constant 0 : index
      %c128 = arith.constant 128 : index
      %573 = vector.load %arg9[%c0_250, %c128] : memref<8x256xf32, #tpu.memory_space<vmem>>, vector<8x64xf32>
      tpu.vector_store %arg9[%c0_250, %c128], %572 {strides = array<i32>} : memref<8x256xf32, #tpu.memory_space<vmem>>, vector<8x64xf32>,
      %574 = vector.extract_strided_slice %561 {offsets = [3, 0], sizes = [1, 64], strides = [1, 1]} : vector<4x64xf32> to vector<1x64xf32>
      %575 = vector.shape_cast %574 : vector<1x64xf32> to vector<1x64xf32>
      %576 = vector.broadcast %575 : vector<1x64xf32> to vector<8x64xf32>
      %c0_251 = arith.constant 0 : index
      %c192 = arith.constant 192 : index
      %577 = vector.load %arg9[%c0_251, %c192] : memref<8x256xf32, #tpu.memory_space<vmem>>, vector<8x64xf32>
      tpu.vector_store %arg9[%c0_251, %c192], %576 {strides = array<i32>} : memref<8x256xf32, #tpu.memory_space<vmem>>, vector<8x64xf32>,
    } else {
    }
    %c0 = arith.constant 0 : index
    %c0_1 = arith.constant 0 : index
    %3 = vector.load %arg9[%c0, %c0_1] : memref<8x256xf32, #tpu.memory_space<vmem>>, vector<8x256xf32>
    %c0_2 = arith.constant 0 : index
    %c0_3 = arith.constant 0 : index
    %c0_4 = arith.constant 0 : index
    %4 = vector.load %arg5[%c0_2, %c0_3, %c0_4] : memref<1x8x256xf32, #tpu.memory_space<vmem>>, vector<1x8x256xf32>
    %5 = vector.shape_cast %4 : vector<1x8x256xf32> to vector<8x256xf32>
    %6 = arith.mulf %5, %3 : vector<8x256xf32>
    %c0_5 = arith.constant 0 : index
    %c0_6 = arith.constant 0 : index
    %c0_7 = arith.constant 0 : index
    %7 = vector.load %arg6[%c0_5, %c0_6, %c0_7] : memref<1x8x256xf32, #tpu.memory_space<vmem>>, vector<1x8x256xf32>
    %8 = vector.shape_cast %7 : vector<1x8x256xf32> to vector<8x256xf32>
    %9 = vector.shape_cast %6 : vector<8x256xf32> to vector<1x8x256xf32>
    tpu.vector_store %arg6[%c0_5, %c0_6, %c0_7], %9 {strides = array<i32>} : memref<1x8x256xf32, #tpu.memory_space<vmem>>, vector<1x8x256xf32>,
    return
  }
  func.func @transform_0(%arg0: i32, %arg1: i32, %arg2: memref<98xf32, #tpu.memory_space<smem>>) -> (i32, i32, i32, i32) {
    %c0_i32 = arith.constant 0 : i32
    %c0_i32_0 = arith.constant 0 : i32
    %c0_i32_1 = arith.constant 0 : i32
    %c0_i32_2 = arith.constant 0 : i32
    return %arg0, %c0_i32, %c0_i32_0, %c0_i32_1 : i32, i32, i32, i32
  }
  func.func @transform_1(%arg0: i32, %arg1: i32, %arg2: memref<98xf32, #tpu.memory_space<smem>>) -> (i32, i32) {
    %c0_i32 = arith.constant 0 : i32
    %c0_i32_0 = arith.constant 0 : i32
    %c0_i32_1 = arith.constant 0 : i32
    return %c0_i32, %c0_i32_0 : i32, i32
  }
  func.func @transform_2(%arg0: i32, %arg1: i32, %arg2: memref<98xf32, #tpu.memory_space<smem>>) -> (i32, i32, i32) {
    %c0_i32 = arith.constant 0 : i32
    %c0_i32_0 = arith.constant 0 : i32
    return %arg0, %arg1, %c0_i32 : i32, i32, i32
  }
  func.func @transform_3(%arg0: i32, %arg1: i32, %arg2: memref<98xf32, #tpu.memory_space<smem>>) -> (i32, i32, i32) {
    %c0_i32 = arith.constant 0 : i32
    %c0_i32_0 = arith.constant 0 : i32
    return %arg0, %arg1, %c0_i32 : i32, i32, i32
  }
}

</mosaic_0001>

<llo_original>
// kernel: tpu_custom_call.1
$region0: #{tpu_custom_call.1}
  #allocation0 [shape = 'u32[]', space=smem, size = 0x4, offset = 0x4, fixed_abs, tag = 'smem constant byte address 0x4 - core index']
  #allocation1 [shape = 'u32[144,128]{1,0:T(1,128)}', space=vmem, size = 0x12000, scoped, tag = 'internal scratch']
  #allocation2 [shape = 'f32[4,166]{1,0:T(4,128)}', space=vmem, size = 0x1000, scoped, tag = 'scratch operand']
  #allocation3 [shape = 'f32[4,166]{1,0:T(4,128)}', space=vmem, size = 0x1000, scoped, tag = 'scratch operand']
  #allocation4 [shape = 'f32[8,256]{1,0:T(8,128)}', space=vmem, size = 0x2000, scoped, tag = 'scratch operand']
  #allocation5 [shape = 's32[1]{0}', space=sflag, size = 0x4, scoped, tag = 'scoped memory for tpu_custom_call.1']
  #allocation6 [shape = 'u8[512]{0}', space=smem, size = 0x200, scoped, tag = 'prefetched SMEM operand 0']
  %s0 = inlined_call_operand.hbm [shape: f32[98], index: 0, kind: input, shape index: {}]
  %s1 = inlined_call_operand.hbm [shape: f32[2,4,4,64], index: 1, kind: input, shape index: {}]
  %s2 = inlined_call_operand.vmem [shape: s32[4,64], index: 2, kind: input, shape index: {}]
  %s3 = inlined_call_operand.hbm [shape: f32[2,8,256], index: 3, kind: input, shape index: {}]
  %s4 = inlined_call_operand.hbm [shape: f32[2,8,256], index: 4, kind: output, shape index: {}]
  %s5 = sld [smem:[#allocation0]]
  $region57: #{tpu_custom_call.1} parent=0
    _
  %s7 = ssub.s32 1, %s5
  %s8 = scalar_select 0, %s7, %s5
  %10 = dma.hbm_to_smem %s0, 16, [#allocation6], [#allocation5]
  %11 = dma.done [#allocation5], 16
  %12 = sfence
  $region1: #{tpu_custom_call.1} parent=0
    #allocation7 [shape = 'u8[16384]{0}', space=vmem, size = 0x4000, scoped, tag = 'input window, operand 1']
    #allocation8 [shape = 's32[2]{0}', space=sflag, size = 0x8, scoped, tag = 'scoped memory for tpu_custom_call.1']
    #allocation9 [shape = 's32[2]{0}', space=sflag, size = 0x8, scoped, tag = 'scoped memory for tpu_custom_call.1']
    #allocation10 [shape = 'u8[16384]{0}', space=vmem, size = 0x4000, scoped, tag = 'input window, operand 3']
    #allocation11 [shape = 's32[2]{0}', space=sflag, size = 0x8, scoped, tag = 'scoped memory for tpu_custom_call.1']
    #allocation12 [shape = 'u8[16384]{0}', space=vmem, size = 0x4000, scoped, tag = 'output window, operand 0']
    %13 = vsyncpa [#allocation8], 0
    %s14 = scalar_lea.sflag [#allocation8], 1
    %15 = vsyncpa %s14, 0
    %16 = vsyncpa [#allocation11], 0
    %s17 = scalar_lea.sflag [#allocation11], 1
    %18 = vsyncpa %s17, 0
    %19 = vsyncpa [#allocation9], 0
    %s20 = scalar_lea.sflag [#allocation9], 1
    %21 = vsyncpa %s20, 0
    loop: start=0, step=1, limit=4
    $region2: #{tpu_custom_call.1} parent=1 // loop_pre_header
      _
    $region3: #{tpu_custom_call.1} parent=1 // loop_header
      %s23 = sphi 0, %s27
      %p24 = scmp.ge.s32.totalorder %s23, 4
      %s30 = sphi 0, %s42
      %s31 = sphi 0, %s38
      %s32 = sphi 0, %s30
      %s33 = sphi 0, %s31
      %s34 = sphi 0, %s32
      %s35 = sphi 0, %s33
      %s45 = sphi 0, %s47
      %s48 = sphi 0, %s45
      %s49 = sphi 0, %s48
      %s65 = sphi 0, %s49
      %s69 = sphi 0, %s69
      %s71 = sphi 0, %s69
      %s72 = sphi 0, %s71
      %s86 = sphi 0, %s72
      %s94 = sphi 0, %s96
      %s97 = sphi 0, %s94
      %s98 = sphi 0, %s97
      %s114 = sphi 0, %s98
      %s122 = sphi 0, %s124
      %s125 = sphi 0, %s122
      %s126 = sphi 0, %s125
      %s142 = sphi 0, %s126
    $region4: #{tpu_custom_call.1} parent=1 // loop_header_branch
      %26 = sbr.rel (%p24) target = $region8
    $region5: #{tpu_custom_call.1} parent=1 // loop_body
      %s28 = ssub.s32 %s23, 1
      %s29 = ssub.s32 %s23, 2
      %s36 = sadd.s32 1, %s31
      %p37 = scmp.ge.s32.totalorder %s36, 1
      %s38 = scalar_select %p37, 0, %s36
      %s39 = sadd.s32 1, %s30
      %s40 = scalar_select %p37, %s39, %s30
      %p41 = scmp.ge.s32.totalorder %s40, 2
      %s42 = scalar_select %p41, 0, %s40
      %s43 = ssub.s32 %s30, %s42
      %p44 = scmp.eq.s32.totalorder %s43, 0
      %s46 = sadd.s32 %s45, 1
      %s47 = scalar_select %p44, %s45, %s46
      %p50 = pneg %p44
      %p51 = scmp.eq.s32.totalorder %s23, 1
      %p52 = por %p50, %p51
      %p53 = scmp.ne.s32.totalorder %s45, %s48
      %p54 = scmp.eq.s32.totalorder %s23, 0
      %p55 = por %p53, %p54
      %p56 = scmp.ne.s32.totalorder %s45, %s48
      %p57 = scmp.eq.s32.totalorder %s28, 1
      %p58 = por %p56, %p57
      %p59 = scmp.ne.s32.totalorder %s48, %s49
      %p60 = scmp.eq.s32.totalorder %s28, 0
      %p61 = por %p59, %p60
      %p62 = scmp.ne.s32.totalorder %s48, %s49
      %p63 = scmp.eq.s32.totalorder %s29, 1
      %p64 = por %p62, %p63
      %p66 = scmp.ne.s32.totalorder %s49, %s65
      %p67 = scmp.eq.s32.totalorder %s29, 0
      %p68 = por %p66, %p67
      %s70 = sadd.s32 %s69, 1
      %p73 = scmp.eq.s32.totalorder %s23, 1
      %p74 = scmp.ne.s32.totalorder %s69, %s71
      %p75 = scmp.eq.s32.totalorder %s23, 0
      %p76 = por %p74, %p75
      %p77 = scmp.ne.s32.totalorder %s69, %s71
      %p78 = scmp.eq.s32.totalorder %s28, 1
      %p79 = por %p77, %p78
      %p80 = scmp.ne.s32.totalorder %s71, %s72
      %p81 = scmp.eq.s32.totalorder %s28, 0
      %p82 = por %p80, %p81
      %p83 = scmp.ne.s32.totalorder %s71, %s72
      %p84 = scmp.eq.s32.totalorder %s29, 1
      %p85 = por %p83, %p84
      %p87 = scmp.ne.s32.totalorder %s72, %s86
      %p88 = scmp.eq.s32.totalorder %s29, 0
      %p89 = por %p87, %p88
      %s90 = ssub.s32 %s30, %s42
      %s91 = ssub.s32 %s31, %s38
      %s92 = sor.u32 %s90, %s91
      %p93 = scmp.eq.s32.totalorder %s92, 0
      %s95 = sadd.s32 %s94, 1
      %s96 = scalar_select %p93, %s94, %s95
      %p99 = pneg %p93
      %p100 = scmp.eq.s32.totalorder %s23, 1
      %p101 = por %p99, %p100
      %p102 = scmp.ne.s32.totalorder %s94, %s97
      %p103 = scmp.eq.s32.totalorder %s23, 0
      %p104 = por %p102, %p103
      %p105 = scmp.ne.s32.totalorder %s94, %s97
      %p106 = scmp.eq.s32.totalorder %s28, 1
      %p107 = por %p105, %p106
      %p108 = scmp.ne.s32.totalorder %s97, %s98
      %p109 = scmp.eq.s32.totalorder %s28, 0
      %p110 = por %p108, %p109
      %p111 = scmp.ne.s32.totalorder %s97, %s98
      %p112 = scmp.eq.s32.totalorder %s29, 1
      %p113 = por %p111, %p112
      %p115 = scmp.ne.s32.totalorder %s98, %s114
      %p116 = scmp.eq.s32.totalorder %s29, 0
      %p117 = por %p115, %p116
      %s118 = ssub.s32 %s30, %s42
      %s119 = ssub.s32 %s31, %s38
      %s120 = sor.u32 %s118, %s119
      %p121 = scmp.eq.s32.totalorder %s120, 0
      %s123 = sadd.s32 %s122, 1
      %s124 = scalar_select %p121, %s122, %s123
      %p127 = pneg %p121
      %p128 = scmp.eq.s32.totalorder %s23, 1
      %p129 = por %p127, %p128
      %p130 = scmp.ne.s32.totalorder %s122, %s125
      %p131 = scmp.eq.s32.totalorder %s23, 0
      %p132 = por %p130, %p131
      %p133 = scmp.ne.s32.totalorder %s122, %s125
      %p134 = scmp.eq.s32.totalorder %s28, 1
      %p135 = por %p133, %p134
      %p136 = scmp.ne.s32.totalorder %s125, %s126
      %p137 = scmp.eq.s32.totalorder %s28, 0
      %p138 = por %p136, %p137
      %p139 = scmp.ne.s32.totalorder %s125, %s126
      %p140 = scmp.eq.s32.totalorder %s29, 1
      %p141 = por %p139, %p140
      %p143 = scmp.ne.s32.totalorder %s126, %s142
      %p144 = scmp.eq.s32.totalorder %s29, 0
      %p145 = por %p143, %p144
      %p146 = scmp.le.s32.totalorder 1, %s23
      %p147 = scmp.lt.s32.totalorder %s23, 3
      %p148 = pnand %p146, %p147
      %p149 = pneg %p148
      // Predicated region
      $region9: #{tpu_custom_call.1} parent=5 // pred_check
        _
      $region10: #{tpu_custom_call.1} parent=5 // pred_check_branch
        %151 = sbr.rel (%p148) target = $region12
      $region11: #{tpu_custom_call.1} parent=5 // pred_region
        %s152 = ssub.s32 %s23, 1
        // Predicated region
        $region13: #{tpu_custom_call.1} parent=11 // pred_check
          %p153 = pneg %p82
        $region14: #{tpu_custom_call.1} parent=11 // pred_check_branch
          %155 = sbr.rel (%p153) target = $region16
        $region15: #{tpu_custom_call.1} parent=11 // pred_region
          _
        $region16: #{tpu_custom_call.1} parent=11 // pred_fallthru
          _
      $region12: #{tpu_custom_call.1} parent=5 // pred_fallthru
        _
      %p156 = scmp.lt.s32.totalorder %s23, 2
      // Predicated region
      $region17: #{tpu_custom_call.1} parent=5 // pred_check
        %p157 = pneg %p156
      $region18: #{tpu_custom_call.1} parent=5 // pred_check_branch
        %159 = sbr.rel (%p157) target = $region20
      $region19: #{tpu_custom_call.1} parent=5 // pred_region
        // Predicated region
        $region21: #{tpu_custom_call.1} parent=19 // pred_check
          %p160 = pneg %p55
        $region22: #{tpu_custom_call.1} parent=19 // pred_check_branch
          %162 = sbr.rel (%p160) target = $region24
        $region23: #{tpu_custom_call.1} parent=19 // pred_region
          %s163 = sand.u32 %s45, 1
          %s164 = scalar_lea.sflag [#allocation8], %s163
          %s165 = sand.u32 %s45, 1
          %s166 = smul.addr %s165, 16
          %s167 = scalar_lea.vmem [#allocation7], %s166
          %s169 = ssub.s32 256, 256
          %170 = vsyncadd %s164, %s169
          %s171 = smul.addr %s30, 4
          %s172 = smul.addr %s171, 64
          %s173 = scalar_lea.hbm %s1, %s172
          %s174 = sshll.u32 %s167, 4
          %s175 = int_to_ptr.vmem [resolvable:$true] %s174
          %180 = dma.hbm_to_vmem [thread:$0]  %s173, 256, %s175, %s164, 64, 64, 4
        $region24: #{tpu_custom_call.1} parent=19 // pred_fallthru
          _
        // Predicated region
        $region25: #{tpu_custom_call.1} parent=19 // pred_check
          %p181 = pneg %p104
        $region26: #{tpu_custom_call.1} parent=19 // pred_check_branch
          %183 = sbr.rel (%p181) target = $region28
        $region27: #{tpu_custom_call.1} parent=19 // pred_region
          %s184 = sand.u32 %s94, 1
          %s185 = scalar_lea.sflag [#allocation11], %s184
          %s186 = sand.u32 %s94, 1
          %s187 = smul.addr %s186, 16
          %s188 = scalar_lea.vmem [#allocation10], %s187
          %s190 = ssub.s32 256, 256
          %191 = vsyncadd %s185, %s190
          %s192 = smul.addr %s31, 2
          %s193 = smul.addr %s30, 2
          %s194 = sadd.s32 %s192, %s193
          %s195 = smul.addr %s194, 128
          %s196 = scalar_lea.hbm %s3, %s195
          %s198 = sshll.u32 %s188, 4
          %s199 = int_to_ptr.vmem [resolvable:$true] %s198
          %201 = dma.hbm_to_vmem [thread:$0]  %s196, 256, %s199, %s185
        $region28: #{tpu_custom_call.1} parent=19 // pred_fallthru
          _
      $region20: #{tpu_custom_call.1} parent=5 // pred_fallthru
        _
      %p202 = scmp.le.s32.totalorder 1, %s23
      %p203 = scmp.lt.s32.totalorder %s23, 3
      %p204 = pnand %p202, %p203
      %p205 = pneg %p204
      // Predicated region
      $region29: #{tpu_custom_call.1} parent=5 // pred_check
        _
      $region30: #{tpu_custom_call.1} parent=5 // pred_check_branch
        %207 = sbr.rel (%p204) target = $region32
      $region31: #{tpu_custom_call.1} parent=5 // pred_region
        %s208 = ssub.s32 %s23, 1
        %s209 = sand.u32 %s48, 1
        %s210 = scalar_lea.sflag [#allocation8], %s209
        %s211 = sand.u32 %s48, 1
        %s212 = smul.addr %s211, 16
        %s213 = scalar_lea.vmem [#allocation7], %s212
        // Predicated region
        $region33: #{tpu_custom_call.1} parent=31 // pred_check
          %p214 = pneg %p61
        $region34: #{tpu_custom_call.1} parent=31 // pred_check_branch
          %216 = sbr.rel (%p214) target = $region36
        $region35: #{tpu_custom_call.1} parent=31 // pred_region
          %217 = dma.done %s210, 256
        $region36: #{tpu_custom_call.1} parent=31 // pred_fallthru
          _
        %s218 = sand.u32 %s97, 1
        %s219 = scalar_lea.sflag [#allocation11], %s218
        %s220 = sand.u32 %s97, 1
        %s221 = smul.addr %s220, 16
        %s222 = scalar_lea.vmem [#allocation10], %s221
        // Predicated region
        $region37: #{tpu_custom_call.1} parent=31 // pred_check
          %p223 = pneg %p110
        $region38: #{tpu_custom_call.1} parent=31 // pred_check_branch
          %225 = sbr.rel (%p223) target = $region40
        $region39: #{tpu_custom_call.1} parent=31 // pred_region
          %226 = dma.done %s219, 256
        $region40: #{tpu_custom_call.1} parent=31 // pred_fallthru
          _
        %s227 = sand.u32 %s48, 1
        %s228 = scalar_lea.sflag [#allocation8], %s227
        %s229 = sand.u32 %s48, 1
        %s230 = smul.addr %s229, 16
        %s231 = scalar_lea.vmem [#allocation7], %s230
        %p232 = pneg %p61
        %p233 = pneg %p58
        %p234 = pneg %p82
        %p235 = pneg %p79
        %s236 = sand.u32 %s97, 1
        %s237 = scalar_lea.sflag [#allocation11], %s236
        %s238 = sand.u32 %s97, 1
        %s239 = smul.addr %s238, 16
        %s240 = scalar_lea.vmem [#allocation10], %s239
        %p241 = pneg %p110
        %p242 = pneg %p107
        %p243 = pneg %p138
        %p244 = pneg %p135
        %s245 = sand.u32 %s125, 1
        %s246 = scalar_lea.sflag [#allocation9], %s245
        %s247 = sand.u32 %s125, 1
        %s248 = smul.addr %s247, 16
        %s249 = scalar_lea.vmem [#allocation12], %s248
        %p250 = scmp.eq.s32.totalorder %s33, 0
        // Predicated region
        $region41: #{tpu_custom_call.1} parent=31 // pred_check
          %p251 = pneg %p250
        $region42: #{tpu_custom_call.1} parent=31 // pred_check_branch
          %253 = sbr.rel (%p251) target = $region44
        $region43: #{tpu_custom_call.1} parent=31 // pred_region
          %v254 = vld [vmem:[%s213] sm:$0xf]
          %s255 = scalar_lea.vmem %s213, 4 [#allocation7]
          %v256 = vld [vmem:[%s255] sm:$0xf]
          %v257 = vadd.f32 %v254, %v256
          %v258 = vmax.f32 %v254, %v256
          %s259 = scalar_lea.vmem %s213, 8 [#allocation7]
          %v260 = vld [vmem:[%s259] sm:$0xf]
          %v261 = vadd.f32 %v257, %v260
          %v262 = vmax.f32 %v258, %v260
          %s263 = scalar_lea.vmem %s213, 12 [#allocation7]
          %v264 = vld [vmem:[%s263] sm:$0xf]
          %v265 = vadd.f32 %v261, %v264
          %v266 = vmax.f32 %v262, %v264
          %vm267 = vcmask 409600
          %268 = vst.msk [vmem:[#allocation2] sm:$0x1] %vm267, 0.0
          %vm269 = vcmask 1041304
          %vm270 = vcmask 307204
          %vm271 = vmor %vm270, %vm269
          %272 = vst.msk [vmem:[#allocation2 + $0x3] sm:$0x11] %vm271, 0.0
          %274 = vrot.lane.b32.xlu0 %v265, 51
          %v275 = vpop.permute.xlu0 %274
          %vm277 = vcmask 937368
          %278 = vst.msk [vmem:[#allocation2] sm:$0xf] %vm277, %v275
          %v279 = vrot.slane %v265, 7
          %280 = vrot.lane.b32.xlu0 %v279, 115
          %v281 = vpop.permute.xlu0 %280
          %vm283 = vcmask 412673
          %284 = vst.msk [vmem:[#allocation2] sm:$0xe] %vm283, %v281
          %v285 = vrot.slane %v265, 5
          %v286 = vrot.slane %v285, 4
          %287 = vrot.lane.b32.xlu0 %v286, 115
          %v288 = vpop.permute.xlu0 %287
          %v289 = vrot.slane %v288, 4
          %vm290 = vcmask 941056
          %v291 = vsel %vm290, %v289, %v288
          %vm293 = vcmask 1043352
          %vm294 = vcmask 309252
          %vm295 = vmor %vm294, %vm293
          %296 = vst.msk [vmem:[#allocation2] sm:$0x77] %vm295, %v291
          %297 = vst.msk [vmem:[#allocation3] sm:$0x1] %vm267, 0.0
          %298 = vst.msk [vmem:[#allocation3 + $0x3] sm:$0x11] %vm271, 0.0
          %300 = vrot.lane.b32.xlu0 %v266, 51
          %v301 = vpop.permute.xlu0 %300
          %303 = vst.msk [vmem:[#allocation3] sm:$0xf] %vm277, %v301
          %v304 = vrot.slane %v266, 7
          %305 = vrot.lane.b32.xlu0 %v304, 115
          %v306 = vpop.permute.xlu0 %305
          %308 = vst.msk [vmem:[#allocation3] sm:$0xe] %vm283, %v306
          %v309 = vrot.slane %v266, 5
          %v310 = vrot.slane %v309, 4
          %311 = vrot.lane.b32.xlu0 %v310, 115
          %v312 = vpop.permute.xlu0 %311
          %v313 = vrot.slane %v312, 4
          %v314 = vsel %vm290, %v313, %v312
          %316 = vst.msk [vmem:[#allocation3] sm:$0x77] %vm295, %v314
          %s317 = sld [smem:[#allocation6]]
          %s318 = sld [smem:[#allocation6 + $0x1]]
          %s319 = sld [smem:[#allocation6 + $0x2]]
          %s320 = sld [smem:[#allocation6 + $0x3]]
          %s321 = sld [smem:[#allocation6 + $0x4]]
          %s322 = sld [smem:[#allocation6 + $0x5]]
          %s323 = sld [smem:[#allocation6 + $0x6]]
          %s324 = sld [smem:[#allocation6 + $0x7]]
          %s325 = sld [smem:[#allocation6 + $0x8]]
          %s326 = sld [smem:[#allocation6 + $0x9]]
          %s327 = sld [smem:[#allocation6 + $0xa]]
          %s328 = sld [smem:[#allocation6 + $0xb]]
          %s329 = sld [smem:[#allocation6 + $0xc]]
          %s330 = sld [smem:[#allocation6 + $0xd]]
          %s331 = sld [smem:[#allocation6 + $0xe]]
          %s332 = sld [smem:[#allocation6 + $0xf]]
          %s333 = sld [smem:[#allocation6 + $0x10]]
          %s334 = sld [smem:[#allocation6 + $0x11]]
          %s335 = sld [smem:[#allocation6 + $0x12]]
          %s336 = sld [smem:[#allocation6 + $0x13]]
          %s337 = sld [smem:[#allocation6 + $0x14]]
          %s338 = sld [smem:[#allocation6 + $0x15]]
          %s339 = sld [smem:[#allocation6 + $0x16]]
          %s340 = sld [smem:[#allocation6 + $0x17]]
          %s341 = sld [smem:[#allocation6 + $0x18]]
          %s342 = sld [smem:[#allocation6 + $0x19]]
          %s343 = sld [smem:[#allocation6 + $0x1a]]
          %s344 = sld [smem:[#allocation6 + $0x1b]]
          %s345 = sld [smem:[#allocation6 + $0x1c]]
          %s346 = sld [smem:[#allocation6 + $0x1d]]
          %s347 = sld [smem:[#allocation6 + $0x1e]]
          %s348 = sld [smem:[#allocation6 + $0x1f]]
          %s349 = sld [smem:[#allocation6 + $0x20]]
          %s350 = sld [smem:[#allocation6 + $0x21]]
          %s351 = sld [smem:[#allocation6 + $0x22]]
          %s352 = sld [smem:[#allocation6 + $0x23]]
          %s353 = sld [smem:[#allocation6 + $0x24]]
          %s354 = sld [smem:[#allocation6 + $0x25]]
          %s355 = sld [smem:[#allocation6 + $0x26]]
          %s356 = sld [smem:[#allocation6 + $0x27]]
          %s357 = sld [smem:[#allocation6 + $0x28]]
          %s358 = sld [smem:[#allocation6 + $0x29]]
          %s359 = sld [smem:[#allocation6 + $0x2a]]
          %s360 = sld [smem:[#allocation6 + $0x2b]]
          %s361 = sld [smem:[#allocation6 + $0x2c]]
          %s362 = sld [smem:[#allocation6 + $0x2d]]
          %s363 = sld [smem:[#allocation6 + $0x2e]]
          %s364 = sld [smem:[#allocation6 + $0x2f]]
          %s365 = sld [smem:[#allocation6 + $0x30]]
          %s366 = sld [smem:[#allocation6 + $0x31]]
          %s367 = sld [smem:[#allocation6 + $0x32]]
          %s368 = sld [smem:[#allocation6 + $0x33]]
          %s369 = sld [smem:[#allocation6 + $0x34]]
          %s370 = sld [smem:[#allocation6 + $0x35]]
          %s371 = sld [smem:[#allocation6 + $0x36]]
          %s372 = sld [smem:[#allocation6 + $0x37]]
          %s373 = sld [smem:[#allocation6 + $0x38]]
          %s374 = sld [smem:[#allocation6 + $0x39]]
          %s375 = sld [smem:[#allocation6 + $0x3a]]
          %s376 = sld [smem:[#allocation6 + $0x3b]]
          %s377 = sld [smem:[#allocation6 + $0x3c]]
          %s378 = sld [smem:[#allocation6 + $0x3d]]
          %s379 = sld [smem:[#allocation6 + $0x3e]]
          %s380 = sld [smem:[#allocation6 + $0x3f]]
          %s381 = sld [smem:[#allocation6 + $0x40]]
          %s382 = sld [smem:[#allocation6 + $0x41]]
          %s383 = sld [smem:[#allocation6 + $0x42]]
          %s384 = sld [smem:[#allocation6 + $0x43]]
          %s385 = sld [smem:[#allocation6 + $0x44]]
          %s386 = sld [smem:[#allocation6 + $0x45]]
          %s387 = sld [smem:[#allocation6 + $0x46]]
          %s388 = sld [smem:[#allocation6 + $0x47]]
          %s389 = sld [smem:[#allocation6 + $0x48]]
          %s390 = sld [smem:[#allocation6 + $0x49]]
          %s391 = sld [smem:[#allocation6 + $0x4a]]
          %s392 = sld [smem:[#allocation6 + $0x4b]]
          %s393 = sld [smem:[#allocation6 + $0x4c]]
          %s394 = sld [smem:[#allocation6 + $0x4d]]
          %s395 = sld [smem:[#allocation6 + $0x4e]]
          %s396 = sld [smem:[#allocation6 + $0x4f]]
          %s397 = sld [smem:[#allocation6 + $0x50]]
          %s398 = sld [smem:[#allocation6 + $0x51]]
          %s399 = sld [smem:[#allocation6 + $0x52]]
          %s400 = sld [smem:[#allocation6 + $0x53]]
          %s401 = sld [smem:[#allocation6 + $0x54]]
          %s402 = sld [smem:[#allocation6 + $0x55]]
          %s403 = sld [smem:[#allocation6 + $0x56]]
          %s404 = sld [smem:[#allocation6 + $0x57]]
          %s405 = sld [smem:[#allocation6 + $0x58]]
          %s406 = sld [smem:[#allocation6 + $0x59]]
          %s407 = sld [smem:[#allocation6 + $0x5a]]
          %s408 = sld [smem:[#allocation6 + $0x5b]]
          %s409 = sld [smem:[#allocation6 + $0x5c]]
          %s410 = sld [smem:[#allocation6 + $0x5d]]
          %s411 = sld [smem:[#allocation6 + $0x5e]]
          %s412 = sld [smem:[#allocation6 + $0x5f]]
          %s413 = sld [smem:[#allocation6 + $0x60]]
          %s414 = sld [smem:[#allocation6 + $0x61]]
          %v415 = vld [vmem:[%s2] sm:$0xf]
          %v416 = vld [vmem:[#allocation2] sm:$0xf]
          %v417 = vstv %s317
          %v418 = vmul.f32 %v417, %v416
          %v419 = vld [vmem:[#allocation3] sm:$0xf]
          %v420 = vstv %s366
          %v421 = vmul.f32 %v420, %v419
          %v422 = vadd.f32 %v418, %v421
          %v423 = vstv %s324
          %v424 = vmul.f32 %v423, %v416
          %v425 = vstv %s373
          %v426 = vmul.f32 %v425, %v419
          %v427 = vadd.f32 %v424, %v426
          %429 = vrot.lane.b32.xlu0 %v427, 112
          %v430 = vpop.permute.xlu0 %429
          %v432 = vadd.f32 %v422, %v430
          %v433 = vstv %s331
          %v434 = vmul.f32 %v433, %v416
          %v435 = vstv %s380
          %v436 = vmul.f32 %v435, %v419
          %v437 = vadd.f32 %v434, %v436
          %439 = vrot.lane.b32.xlu0 %v437, 96
          %v440 = vpop.permute.xlu0 %439
          %v442 = vadd.f32 %v432, %v440
          %v443 = vstv %s338
          %v444 = vmul.f32 %v443, %v416
          %v445 = vstv %s387
          %v446 = vmul.f32 %v445, %v419
          %v447 = vadd.f32 %v444, %v446
          %449 = vrot.lane.b32.xlu0 %v447, 80
          %v450 = vpop.permute.xlu0 %449
          %v452 = vadd.f32 %v442, %v450
          %v453 = vstv %s345
          %v454 = vmul.f32 %v453, %v416
          %v455 = vstv %s394
          %v456 = vmul.f32 %v455, %v419
          %v457 = vadd.f32 %v454, %v456
          %459 = vrot.lane.b32.xlu0 %v457, 64
          %v460 = vpop.permute.xlu0 %459
          %v462 = vadd.f32 %v452, %v460
          %v463 = vld [vmem:[#allocation2] sm:$0xff]
          %v464 = vstv %s352
          %v465 = vmul.f32 %v464, %v463
          %v466 = vld [vmem:[#allocation3] sm:$0xff]
          %v467 = vstv %s401
          %v468 = vmul.f32 %v467, %v466
          %v469 = vadd.f32 %v465, %v468
          %471 = vrot.lane.b32.xlu0 %v469, 48
          %v472 = vpop.permute.xlu0 %471
          %v473 = vrot.slane %v472, 4
          %vm474 = vcmask 392192
          %v475 = vsel %vm474, %v472, %v473
          %v477 = vadd.f32 %v462, %v475
          %v478 = vstv %s359
          %v479 = vmul.f32 %v478, %v463
          %v480 = vstv %s408
          %v481 = vmul.f32 %v480, %v466
          %v482 = vadd.f32 %v479, %v481
          %484 = vrot.lane.b32.xlu0 %v482, 32
          %v485 = vpop.permute.xlu0 %484
          %v486 = vrot.slane %v485, 4
          %vm487 = vcmask 261120
          %v488 = vsel %vm487, %v485, %v486
          %v490 = vadd.f32 %v477, %v488
          %vm491 = vcmp.ge.s32.totalorder %v415, 3
          %v492 = vsel %vm491, %v490, 0.0
          %v493 = vadd.f32 %v492, 0.0
          %v494 = vstv %s318
          %v495 = vmul.f32 %v494, %v416
          %v496 = vstv %s367
          %v497 = vmul.f32 %v496, %v419
          %v498 = vadd.f32 %v495, %v497
          %v499 = vstv %s325
          %v500 = vmul.f32 %v499, %v416
          %v501 = vstv %s374
          %v502 = vmul.f32 %v501, %v419
          %v503 = vadd.f32 %v500, %v502
          %505 = vrot.lane.b32.xlu0 %v503, 112
          %v506 = vpop.permute.xlu0 %505
          %v508 = vadd.f32 %v498, %v506
          %v509 = vstv %s332
          %v510 = vmul.f32 %v509, %v416
          %v511 = vstv %s381
          %v512 = vmul.f32 %v511, %v419
          %v513 = vadd.f32 %v510, %v512
          %515 = vrot.lane.b32.xlu0 %v513, 96
          %v516 = vpop.permute.xlu0 %515
          %v518 = vadd.f32 %v508, %v516
          %v519 = vstv %s339
          %v520 = vmul.f32 %v519, %v416
          %v521 = vstv %s388
          %v522 = vmul.f32 %v521, %v419
          %v523 = vadd.f32 %v520, %v522
          %525 = vrot.lane.b32.xlu0 %v523, 80
          %v526 = vpop.permute.xlu0 %525
          %v528 = vadd.f32 %v518, %v526
          %v529 = vstv %s346
          %v530 = vmul.f32 %v529, %v463
          %v531 = vstv %s395
          %v532 = vmul.f32 %v531, %v466
          %v533 = vadd.f32 %v530, %v532
          %535 = vrot.lane.b32.xlu0 %v533, 64
          %v536 = vpop.permute.xlu0 %535
          %v537 = vrot.slane %v536, 4
          %vm538 = vcmask 523264
          %v539 = vsel %vm538, %v536, %v537
          %v541 = vadd.f32 %v528, %v539
          %v542 = vstv %s353
          %v543 = vmul.f32 %v542, %v463
          %v544 = vstv %s402
          %v545 = vmul.f32 %v544, %v466
          %v546 = vadd.f32 %v543, %v545
          %548 = vrot.lane.b32.xlu0 %v546, 48
          %v549 = vpop.permute.xlu0 %548
          %v550 = vrot.slane %v549, 4
          %v551 = vsel %vm474, %v549, %v550
          %v553 = vadd.f32 %v541, %v551
          %v554 = vstv %s360
          %v555 = vmul.f32 %v554, %v463
          %v556 = vstv %s409
          %v557 = vmul.f32 %v556, %v466
          %v558 = vadd.f32 %v555, %v557
          %560 = vrot.lane.b32.xlu0 %v558, 32
          %v561 = vpop.permute.xlu0 %560
          %v562 = vrot.slane %v561, 4
          %v563 = vsel %vm487, %v561, %v562
          %v565 = vadd.f32 %v553, %v563
          %vm566 = vcmp.ge.s32.totalorder %v415, 2
          %568 = vrot.lane.b32.xlu0 %v565, 127
          %v569 = vpop.permute.xlu0 %568
          %v571 = vsel %vm566, %v569, 0.0
          %v572 = vadd.f32 %v493, %v571
          %v573 = vstv %s319
          %v574 = vmul.f32 %v573, %v416
          %v575 = vstv %s368
          %v576 = vmul.f32 %v575, %v419
          %v577 = vadd.f32 %v574, %v576
          %v578 = vstv %s326
          %v579 = vmul.f32 %v578, %v416
          %v580 = vstv %s375
          %v581 = vmul.f32 %v580, %v419
          %v582 = vadd.f32 %v579, %v581
          %584 = vrot.lane.b32.xlu0 %v582, 112
          %v585 = vpop.permute.xlu0 %584
          %v587 = vadd.f32 %v577, %v585
          %v588 = vstv %s333
          %v589 = vmul.f32 %v588, %v416
          %v590 = vstv %s382
          %v591 = vmul.f32 %v590, %v419
          %v592 = vadd.f32 %v589, %v591
          %594 = vrot.lane.b32.xlu0 %v592, 96
          %v595 = vpop.permute.xlu0 %594
          %v597 = vadd.f32 %v587, %v595
          %v598 = vstv %s340
          %v599 = vmul.f32 %v598, %v416
          %v600 = vstv %s389
          %v601 = vmul.f32 %v600, %v419
          %v602 = vadd.f32 %v599, %v601
          %604 = vrot.lane.b32.xlu0 %v602, 80
          %v605 = vpop.permute.xlu0 %604
          %v607 = vadd.f32 %v597, %v605
          %v608 = vstv %s347
          %v609 = vmul.f32 %v608, %v463
          %v610 = vstv %s396
          %v611 = vmul.f32 %v610, %v466
          %v612 = vadd.f32 %v609, %v611
          %614 = vrot.lane.b32.xlu0 %v612, 64
          %v615 = vpop.permute.xlu0 %614
          %v616 = vrot.slane %v615, 4
          %v617 = vsel %vm538, %v615, %v616
          %v619 = vadd.f32 %v607, %v617
          %v620 = vstv %s354
          %v621 = vmul.f32 %v620, %v463
          %v622 = vstv %s403
          %v623 = vmul.f32 %v622, %v466
          %v624 = vadd.f32 %v621, %v623
          %626 = vrot.lane.b32.xlu0 %v624, 48
          %v627 = vpop.permute.xlu0 %626
          %v628 = vrot.slane %v627, 4
          %v629 = vsel %vm474, %v627, %v628
          %v631 = vadd.f32 %v619, %v629
          %v632 = vstv %s361
          %v633 = vmul.f32 %v632, %v463
          %v634 = vstv %s410
          %v635 = vmul.f32 %v634, %v466
          %v636 = vadd.f32 %v633, %v635
          %638 = vrot.lane.b32.xlu0 %v636, 32
          %v639 = vpop.permute.xlu0 %638
          %v640 = vrot.slane %v639, 4
          %v641 = vsel %vm487, %v639, %v640
          %v643 = vadd.f32 %v631, %v641
          %vm644 = vcmp.ge.s32.totalorder %v415, 1
          %646 = vrot.lane.b32.xlu0 %v643, 126
          %v647 = vpop.permute.xlu0 %646
          %v649 = vsel %vm644, %v647, 0.0
          %v650 = vadd.f32 %v572, %v649
          %v651 = vstv %s320
          %v652 = vmul.f32 %v651, %v416
          %v653 = vstv %s369
          %v654 = vmul.f32 %v653, %v419
          %v655 = vadd.f32 %v652, %v654
          %v656 = vstv %s327
          %v657 = vmul.f32 %v656, %v416
          %v658 = vstv %s376
          %v659 = vmul.f32 %v658, %v419
          %v660 = vadd.f32 %v657, %v659
          %662 = vrot.lane.b32.xlu0 %v660, 112
          %v663 = vpop.permute.xlu0 %662
          %v665 = vadd.f32 %v655, %v663
          %v666 = vstv %s334
          %v667 = vmul.f32 %v666, %v416
          %v668 = vstv %s383
          %v669 = vmul.f32 %v668, %v419
          %v670 = vadd.f32 %v667, %v669
          %672 = vrot.lane.b32.xlu0 %v670, 96
          %v673 = vpop.permute.xlu0 %672
          %v675 = vadd.f32 %v665, %v673
          %v676 = vstv %s341
          %v677 = vmul.f32 %v676, %v416
          %v678 = vstv %s390
          %v679 = vmul.f32 %v678, %v419
          %v680 = vadd.f32 %v677, %v679
          %682 = vrot.lane.b32.xlu0 %v680, 80
          %v683 = vpop.permute.xlu0 %682
          %v685 = vadd.f32 %v675, %v683
          %v686 = vstv %s348
          %v687 = vmul.f32 %v686, %v463
          %v688 = vstv %s397
          %v689 = vmul.f32 %v688, %v466
          %v690 = vadd.f32 %v687, %v689
          %692 = vrot.lane.b32.xlu0 %v690, 64
          %v693 = vpop.permute.xlu0 %692
          %v694 = vrot.slane %v693, 4
          %v695 = vsel %vm538, %v693, %v694
          %v697 = vadd.f32 %v685, %v695
          %v698 = vstv %s355
          %v699 = vmul.f32 %v698, %v463
          %v700 = vstv %s404
          %v701 = vmul.f32 %v700, %v466
          %v702 = vadd.f32 %v699, %v701
          %704 = vrot.lane.b32.xlu0 %v702, 48
          %v705 = vpop.permute.xlu0 %704
          %v706 = vrot.slane %v705, 4
          %v707 = vsel %vm474, %v705, %v706
          %v709 = vadd.f32 %v697, %v707
          %v710 = vstv %s362
          %v711 = vmul.f32 %v710, %v463
          %v712 = vstv %s411
          %v713 = vmul.f32 %v712, %v466
          %v714 = vadd.f32 %v711, %v713
          %716 = vrot.lane.b32.xlu0 %v714, 32
          %v717 = vpop.permute.xlu0 %716
          %v718 = vrot.slane %v717, 4
          %v719 = vsel %vm487, %v717, %v718
          %v721 = vadd.f32 %v709, %v719
          %723 = vrot.lane.b32.xlu0 %v721, 125
          %v724 = vpop.permute.xlu0 %723
          %v726 = vadd.f32 %v650, %v724
          %v727 = vstv %s321
          %v728 = vmul.f32 %v727, %v416
          %v729 = vstv %s370
          %v730 = vmul.f32 %v729, %v419
          %v731 = vadd.f32 %v728, %v730
          %v732 = vstv %s328
          %v733 = vmul.f32 %v732, %v416
          %v734 = vstv %s377
          %v735 = vmul.f32 %v734, %v419
          %v736 = vadd.f32 %v733, %v735
          %738 = vrot.lane.b32.xlu0 %v736, 112
          %v739 = vpop.permute.xlu0 %738
          %v741 = vadd.f32 %v731, %v739
          %v742 = vstv %s335
          %v743 = vmul.f32 %v742, %v416
          %v744 = vstv %s384
          %v745 = vmul.f32 %v744, %v419
          %v746 = vadd.f32 %v743, %v745
          %748 = vrot.lane.b32.xlu0 %v746, 96
          %v749 = vpop.permute.xlu0 %748
          %v751 = vadd.f32 %v741, %v749
          %v752 = vstv %s342
          %v753 = vmul.f32 %v752, %v416
          %v754 = vstv %s391
          %v755 = vmul.f32 %v754, %v419
          %v756 = vadd.f32 %v753, %v755
          %758 = vrot.lane.b32.xlu0 %v756, 80
          %v759 = vpop.permute.xlu0 %758
          %v761 = vadd.f32 %v751, %v759
          %v762 = vstv %s349
          %v763 = vmul.f32 %v762, %v463
          %v764 = vstv %s398
          %v765 = vmul.f32 %v764, %v466
          %v766 = vadd.f32 %v763, %v765
          %768 = vrot.lane.b32.xlu0 %v766, 64
          %v769 = vpop.permute.xlu0 %768
          %v770 = vrot.slane %v769, 4
          %v771 = vsel %vm538, %v769, %v770
          %v773 = vadd.f32 %v761, %v771
          %v774 = vstv %s356
          %v775 = vmul.f32 %v774, %v463
          %v776 = vstv %s405
          %v777 = vmul.f32 %v776, %v466
          %v778 = vadd.f32 %v775, %v777
          %780 = vrot.lane.b32.xlu0 %v778, 48
          %v781 = vpop.permute.xlu0 %780
          %v782 = vrot.slane %v781, 4
          %v783 = vsel %vm474, %v781, %v782
          %v785 = vadd.f32 %v773, %v783
          %v786 = vstv %s363
          %v787 = vmul.f32 %v786, %v463
          %v788 = vstv %s412
          %v789 = vmul.f32 %v788, %v466
          %v790 = vadd.f32 %v787, %v789
          %792 = vrot.lane.b32.xlu0 %v790, 32
          %v793 = vpop.permute.xlu0 %792
          %v794 = vrot.slane %v793, 4
          %v795 = vsel %vm487, %v793, %v794
          %v797 = vadd.f32 %v785, %v795
          %vm798 = vcmp.lt.s32.totalorder %v415, 15
          %800 = vrot.lane.b32.xlu0 %v797, 124
          %v801 = vpop.permute.xlu0 %800
          %v803 = vsel %vm798, %v801, 0.0
          %v804 = vadd.f32 %v726, %v803
          %v805 = vstv %s322
          %v806 = vmul.f32 %v805, %v416
          %v807 = vstv %s371
          %v808 = vmul.f32 %v807, %v419
          %v809 = vadd.f32 %v806, %v808
          %v810 = vstv %s329
          %v811 = vmul.f32 %v810, %v416
          %v812 = vstv %s378
          %v813 = vmul.f32 %v812, %v419
          %v814 = vadd.f32 %v811, %v813
          %816 = vrot.lane.b32.xlu0 %v814, 112
          %v817 = vpop.permute.xlu0 %816
          %v819 = vadd.f32 %v809, %v817
          %v820 = vstv %s336
          %v821 = vmul.f32 %v820, %v416
          %v822 = vstv %s385
          %v823 = vmul.f32 %v822, %v419
          %v824 = vadd.f32 %v821, %v823
          %826 = vrot.lane.b32.xlu0 %v824, 96
          %v827 = vpop.permute.xlu0 %826
          %v829 = vadd.f32 %v819, %v827
          %v830 = vstv %s343
          %v831 = vmul.f32 %v830, %v416
          %v832 = vstv %s392
          %v833 = vmul.f32 %v832, %v419
          %v834 = vadd.f32 %v831, %v833
          %836 = vrot.lane.b32.xlu0 %v834, 80
          %v837 = vpop.permute.xlu0 %836
          %v839 = vadd.f32 %v829, %v837
          %v840 = vstv %s350
          %v841 = vmul.f32 %v840, %v463
          %v842 = vstv %s399
          %v843 = vmul.f32 %v842, %v466
          %v844 = vadd.f32 %v841, %v843
          %846 = vrot.lane.b32.xlu0 %v844, 64
          %v847 = vpop.permute.xlu0 %846
          %v848 = vrot.slane %v847, 4
          %v849 = vsel %vm538, %v847, %v848
          %v851 = vadd.f32 %v839, %v849
          %v852 = vstv %s357
          %v853 = vmul.f32 %v852, %v463
          %v854 = vstv %s406
          %v855 = vmul.f32 %v854, %v466
          %v856 = vadd.f32 %v853, %v855
          %858 = vrot.lane.b32.xlu0 %v856, 48
          %v859 = vpop.permute.xlu0 %858
          %v860 = vrot.slane %v859, 4
          %v861 = vsel %vm474, %v859, %v860
          %v863 = vadd.f32 %v851, %v861
          %v864 = vstv %s364
          %v865 = vmul.f32 %v864, %v463
          %v866 = vstv %s413
          %v867 = vmul.f32 %v866, %v466
          %v868 = vadd.f32 %v865, %v867
          %870 = vrot.lane.b32.xlu0 %v868, 32
          %v871 = vpop.permute.xlu0 %870
          %v872 = vrot.slane %v871, 4
          %v873 = vsel %vm487, %v871, %v872
          %v875 = vadd.f32 %v863, %v873
          %vm876 = vcmp.lt.s32.totalorder %v415, 14
          %878 = vrot.lane.b32.xlu0 %v875, 123
          %v879 = vpop.permute.xlu0 %878
          %v881 = vsel %vm876, %v879, 0.0
          %v882 = vadd.f32 %v804, %v881
          %v883 = vstv %s323
          %v884 = vmul.f32 %v883, %v416
          %v885 = vstv %s372
          %v886 = vmul.f32 %v885, %v419
          %v887 = vadd.f32 %v884, %v886
          %v888 = vstv %s330
          %v889 = vmul.f32 %v888, %v416
          %v890 = vstv %s379
          %v891 = vmul.f32 %v890, %v419
          %v892 = vadd.f32 %v889, %v891
          %894 = vrot.lane.b32.xlu0 %v892, 112
          %v895 = vpop.permute.xlu0 %894
          %v897 = vadd.f32 %v887, %v895
          %v898 = vstv %s337
          %v899 = vmul.f32 %v898, %v416
          %v900 = vstv %s386
          %v901 = vmul.f32 %v900, %v419
          %v902 = vadd.f32 %v899, %v901
          %904 = vrot.lane.b32.xlu0 %v902, 96
          %v905 = vpop.permute.xlu0 %904
          %v907 = vadd.f32 %v897, %v905
          %v908 = vstv %s344
          %v909 = vmul.f32 %v908, %v416
          %v910 = vstv %s393
          %v911 = vmul.f32 %v910, %v419
          %v912 = vadd.f32 %v909, %v911
          %914 = vrot.lane.b32.xlu0 %v912, 80
          %v915 = vpop.permute.xlu0 %914
          %v917 = vadd.f32 %v907, %v915
          %v918 = vstv %s351
          %v919 = vmul.f32 %v918, %v463
          %v920 = vstv %s400
          %v921 = vmul.f32 %v920, %v466
          %v922 = vadd.f32 %v919, %v921
          %924 = vrot.lane.b32.xlu0 %v922, 64
          %v925 = vpop.permute.xlu0 %924
          %v926 = vrot.slane %v925, 4
          %v927 = vsel %vm538, %v925, %v926
          %v929 = vadd.f32 %v917, %v927
          %v930 = vstv %s358
          %v931 = vmul.f32 %v930, %v463
          %v932 = vstv %s407
          %v933 = vmul.f32 %v932, %v466
          %v934 = vadd.f32 %v931, %v933
          %936 = vrot.lane.b32.xlu0 %v934, 48
          %v937 = vpop.permute.xlu0 %936
          %v938 = vrot.slane %v937, 4
          %v939 = vsel %vm474, %v937, %v938
          %v941 = vadd.f32 %v929, %v939
          %v942 = vstv %s365
          %v943 = vmul.f32 %v942, %v463
          %v944 = vstv %s414
          %v945 = vmul.f32 %v944, %v466
          %v946 = vadd.f32 %v943, %v945
          %948 = vrot.lane.b32.xlu0 %v946, 32
          %v949 = vpop.permute.xlu0 %948
          %v950 = vrot.slane %v949, 4
          %v951 = vsel %vm487, %v949, %v950
          %v953 = vadd.f32 %v941, %v951
          %vm954 = vcmp.lt.s32.totalorder %v415, 13
          %956 = vrot.lane.b32.xlu0 %v953, 122
          %v957 = vpop.permute.xlu0 %956
          %v959 = vsel %vm954, %v957, 0.0
          %v960 = vadd.f32 %v882, %v959
          %v961 = vxor.u32 %v960, 2147483648
          %v962 = vmul.f32 %v961, 1.442695
          %v963 = vpow.pop %v962
          %v964 = vadd.f32 %v963, 1.0
          %v965 = vrcp.pop %v964
          %v966 = vmul.f32 1.0, %v965
          %v967 = vsub.f32 1.0, %v966
          %v968 = vlaneseq
          %v969 = vshrl.u32 %v968, 7
          %v970 = vsub.s32 0, %v969
          %v971 = vrot.slane %v967, %v970
          %972 = vst.msk [vmem:[#allocation4] sm:$0xff] %vm538, %v971
          %v973 = vlaneseq
          %v974 = vshrl.u32 %v973, 7
          %v975 = vsub.s32 1, %v974
          %v976 = vrot.slane %v967, %v975
          %978 = vrot.lane.b32.xlu0 %v976, 64
          %v979 = vpop.permute.xlu0 %978
          %vm981 = vcmask 1048064
          %982 = vst.msk [vmem:[#allocation4] sm:$0xff] %vm981, %v979
          %v983 = vlaneseq
          %v984 = vshrl.u32 %v983, 7
          %v985 = vsub.s32 2, %v984
          %v986 = vrot.slane %v967, %v985
          %987 = vst.msk [vmem:[#allocation4 + $0x8] sm:$0xff] %vm538, %v986
          %v988 = vlaneseq
          %v989 = vshrl.u32 %v988, 7
          %v990 = vsub.s32 3, %v989
          %v991 = vrot.slane %v967, %v990
          %993 = vrot.lane.b32.xlu0 %v991, 64
          %v994 = vpop.permute.xlu0 %993
          %996 = vst.msk [vmem:[#allocation4 + $0x8] sm:$0xff] %vm981, %v994
        $region44: #{tpu_custom_call.1} parent=31 // pred_fallthru
          _
        %v997 = vld [vmem:[#allocation4] sm:$0xff]
        %v998 = vld [vmem:[#allocation4 + $0x8] sm:$0xff]
        %v999 = vld [vmem:[%s222] sm:$0xff]
        %v1000 = vld [vmem:[%s222 + $0x8] sm:$0xff]
        %v1001 = vmul.f32 %v999, %v997
        %v1002 = vmul.f32 %v1000, %v998
        %1003 = vst [vmem:[%s249] sm:$0xff] %v1001
        %1004 = vst [vmem:[%s249 + $0x8] sm:$0xff] %v1002
        %s1005 = sand.u32 %s125, 1
        %s1006 = scalar_lea.sflag [#allocation9], %s1005
        %s1007 = sand.u32 %s125, 1
        %s1008 = smul.addr %s1007, 16
        %s1009 = scalar_lea.vmem [#allocation12], %s1008
        // Predicated region
        $region45: #{tpu_custom_call.1} parent=31 // pred_check
          %p1010 = pneg %p135
        $region46: #{tpu_custom_call.1} parent=31 // pred_check_branch
          %1012 = sbr.rel (%p1010) target = $region48
        $region47: #{tpu_custom_call.1} parent=31 // pred_region
          %s1014 = ssub.s32 256, 256
          %1015 = vsyncadd %s1006, %s1014
          %s1016 = smul.addr %s33, 2
          %s1017 = smul.addr %s32, 2
          %s1018 = sadd.s32 %s1016, %s1017
          %s1019 = smul.addr %s1018, 128
          %s1020 = scalar_lea.hbm %s4, %s1019
          %s1022 = sshll.u32 %s1009, 4
          %s1023 = int_to_ptr.vmem [resolvable:$true] %s1022
          %1025 = dma.vmem_to_hbm [thread:$0]  %s1023, 256, %s1020, %s1006
        $region48: #{tpu_custom_call.1} parent=31 // pred_fallthru
          _
      $region32: #{tpu_custom_call.1} parent=5 // pred_fallthru
        _
      %p1026 = scmp.le.s32.totalorder 2, %s23
      // Predicated region
      $region49: #{tpu_custom_call.1} parent=5 // pred_check
        %p1027 = pneg %p1026
      $region50: #{tpu_custom_call.1} parent=5 // pred_check_branch
        %1029 = sbr.rel (%p1027) target = $region52
      $region51: #{tpu_custom_call.1} parent=5 // pred_region
        %s1030 = ssub.s32 %s23, 2
        // Predicated region
        $region53: #{tpu_custom_call.1} parent=51 // pred_check
          %p1031 = pneg %p141
        $region54: #{tpu_custom_call.1} parent=51 // pred_check_branch
          %1033 = sbr.rel (%p1031) target = $region56
        $region55: #{tpu_custom_call.1} parent=51 // pred_region
          %s1034 = sand.u32 %s126, 1
          %s1035 = scalar_lea.sflag [#allocation9], %s1034
          %s1036 = sand.u32 %s126, 1
          %s1037 = smul.addr %s1036, 16
          %s1038 = scalar_lea.vmem [#allocation12], %s1037
          %1039 = dma.done %s1035, 256
        $region56: #{tpu_custom_call.1} parent=51 // pred_fallthru
          _
      $region52: #{tpu_custom_call.1} parent=5 // pred_fallthru
        _
    $region6: #{tpu_custom_call.1} parent=1 // loop_footer
      %s27 = sadd.s32 1, %s23
    $region7: #{tpu_custom_call.1} parent=1 // loop_footer_branch
      %22 = sbr.rel target = $region3
    $region8: #{tpu_custom_call.1} parent=1 // loop_exit
      _
    %1040 = vsyncpa [#allocation8], 1
    %s1041 = scalar_lea.sflag [#allocation8], 1
    %1042 = vsyncpa %s1041, 1
    %1043 = vsyncpa [#allocation11], 1
    %s1044 = scalar_lea.sflag [#allocation11], 1
    %1045 = vsyncpa %s1044, 1
    %1046 = vsyncpa [#allocation9], 1
    %s1047 = scalar_lea.sflag [#allocation9], 1
    %1048 = vsyncpa %s1047, 1

</llo_original>
